<compile_context>
chip_gen: v7x
topology: tpu7x:2x2x1
jax: 0.10.0
libtpu: 0.0.40
codegen_flags: <defaults>
</compile_context>

<pallas_src>
import functools

import jax
import jax.numpy as jnp
from jax import lax
from jax.experimental import pallas as pl
from jax.experimental.pallas import tpu as pltpu


def _attention_kernel(x_ref, wqkv_ref, wproj_ref, bproj_ref, o_ref,
                      *, num_heads, head_dim, blk_b, seq_len):
    """One grid step handles `blk_b` batch elements.

    x_ref:     (blk_b, N, C)   input tokens (f32)
    wqkv_ref:  (C, 3C)         qkv weight, (in, out), bf16, Q cols pre-scaled
    wproj_ref: (C, C)          proj weight, (in, out), bf16
    bproj_ref: (1, C)          proj bias (f32)
    o_ref:     (blk_b, N, C)   output tokens
    """
    H, D, N, TB = num_heads, head_dim, seq_len, blk_b
    C = H * D

    # Pack batch into the MXU M dimension for the big QKV projection.
    x = x_ref[...].reshape(TB * N, C).astype(jnp.bfloat16)     # (TB*N, C)
    wqkv = wqkv_ref[...]                                        # (C, 3C) bf16
    wproj = wproj_ref[...]                                      # (C, C)  bf16
    bias = bproj_ref[...]                                       # (1, C)  f32

    # QKV projection (qkv_bias=False). Scale already folded into Q columns.
    qkv = jnp.dot(x, wqkv, preferred_element_type=jnp.float32)  # (TB*N, 3C)
    qkv16 = qkv.astype(jnp.bfloat16)                            # one VPU pass

    # Hoisted broadcast of the proj bias; used as accumulator init.
    bias_full = jnp.broadcast_to(bias, (N, C))                  # (N, C) f32

    # Contract trailing dims of q and k directly: no k transpose on the XLU.
    dn_qk = (((1,), (1,)), ((), ()))

    for tb in range(TB):
        r0 = tb * N
        acc = bias_full                                         # lane-dense
        for h in range(H):
            c0 = h * D
            # Column layout of `qkv` matches the PyTorch (B, N, 3, H, D)
            # reshape: q block = [:, 0:C], head h = cols h*D:(h+1)*D.
            q = qkv16[r0:r0 + N, c0:c0 + D]                     # (N, D)
            k = qkv16[r0:r0 + N, C + c0:C + c0 + D]             # (N, D)
            v = qkv16[r0:r0 + N, 2 * C + c0:2 * C + c0 + D]     # (N, D)

            s = lax.dot_general(q, k, dn_qk,
                                preferred_element_type=jnp.float32)  # (N, N)
            s = s - jnp.max(s, axis=-1, keepdims=True)
            p = jnp.exp(s)
            p = p * pl.reciprocal(jnp.sum(p, axis=-1, keepdims=True),
                                  approx=True)

            head_out = jnp.dot(p.astype(jnp.bfloat16), v,
                               preferred_element_type=jnp.float32)   # (N, D)
            # Project this head straight into the lane-dense accumulator:
            # equivalent to concat(heads) @ W_proj^T, but with no lane-dim
            # concatenation and no long-lived head outputs.
            acc = acc + jnp.dot(head_out.astype(jnp.bfloat16),
                                wproj[c0:c0 + D, :],
                                preferred_element_type=jnp.float32)  # (N, C)
        o_ref[tb] = acc.astype(o_ref.dtype)


def prepare_attention_params(w_qkv, w_proj, b_proj, *, num_heads,
                             param_dtype=jnp.bfloat16):
    """One-time weight preparation (do NOT run per call in a serving path).

    w_qkv: (3C, C) PyTorch layout; w_proj: (C, C); b_proj: (C,).
    Returns (wqkv_t, wproj_t, bproj) ready for `attention_pallas`.
    """
    C = w_proj.shape[0]
    head_dim = C // num_heads
    scale = head_dim ** (-0.5)

    wqkv_t = jnp.asarray(w_qkv, jnp.float32).T                  # (C, 3C)
    # Fold the attention scale into the Q output columns.
    wqkv_t = wqkv_t.at[:, :C].multiply(scale)
    wproj_t = jnp.asarray(w_proj, jnp.float32).T                # (C, C)
    bproj = jnp.asarray(b_proj, jnp.float32).reshape(1, C)

    return wqkv_t.astype(param_dtype), wproj_t.astype(param_dtype), bproj


def attention_pallas(x, wqkv_t, wproj_t, bproj, *, num_heads, blk_b=None):
    """x: (B, N, C); weights from `prepare_attention_params`."""
    B, N, C = x.shape
    assert C % num_heads == 0
    head_dim = C // num_heads

    # Pack enough batch elements per step to give the MXU ~128 M-rows.
    if blk_b is None:
        blk_b = max(1, min(B, 128 // max(N, 1)))
    while B % blk_b:
        blk_b -= 1

    kernel = functools.partial(
        _attention_kernel,
        num_heads=num_heads, head_dim=head_dim, blk_b=blk_b, seq_len=N)

    return pl.pallas_call(
        kernel,
        out_shape=jax.ShapeDtypeStruct((B, N, C), x.dtype),
        grid_spec=pltpu.PrefetchScalarGridSpec(
            num_scalar_prefetch=0,
            grid=(B // blk_b,),
            in_specs=[
                pl.BlockSpec((blk_b, N, C), lambda b: (b, 0, 0)),
                # Grid-invariant weights (constant index_map -> fetched once).
                pl.BlockSpec((C, 3 * C), lambda b: (0, 0)),
                pl.BlockSpec((C, C), lambda b: (0, 0)),
                pl.BlockSpec((1, C), lambda b: (0, 0)),
            ],
            out_specs=pl.BlockSpec((blk_b, N, C), lambda b: (b, 0, 0)),
        ),
        compiler_params=pltpu.CompilerParams(
            dimension_semantics=("parallel",),
            vmem_limit_bytes=64 * 1024 * 1024),
    )(x, wqkv_t, wproj_t, bproj)


def attention_ref(x, w_qkv, w_proj, b_proj, *, num_heads):
    """Pure-JAX f32 reference mirroring the PyTorch forward exactly."""
    B, N, C = x.shape
    head_dim = C // num_heads
    scale = head_dim ** (-0.5)
    qkv = x @ w_qkv.T                                    # (B, N, 3C)
    qkv = qkv.reshape(B, N, 3, num_heads, head_dim).transpose(2, 0, 3, 1, 4)
    q, k, v = qkv[0], qkv[1], qkv[2]                     # (B, H, N, D)
    attn = (q @ jnp.swapaxes(k, -2, -1)) * scale
    attn = jax.nn.softmax(attn, axis=-1)
    out = (attn @ v).transpose(0, 2, 1, 3).reshape(B, N, C)
    return out @ w_proj.T + b_proj


if __name__ == "__main__":
    B, N, C = 2, 8, 32
    num_heads = 4

    key = jax.random.PRNGKey(0)
    kx, kq, kp, kb = jax.random.split(key, 4)

    x = jax.random.normal(kx, (B, N, C), dtype=jnp.float32)
    # Deterministic "init" of the Linear params (no checkpoint).
    w_qkv = jax.random.normal(kq, (3 * C, C), dtype=jnp.float32) * (C ** -0.5)
    w_proj = jax.random.normal(kp, (C, C), dtype=jnp.float32) * (C ** -0.5)
    b_proj = jax.random.normal(kb, (C,), dtype=jnp.float32) * 0.02

    wqkv_t, wproj_t, bproj = prepare_attention_params(
        w_qkv, w_proj, b_proj, num_heads=num_heads)

    out = attention_pallas(x, wqkv_t, wproj_t, bproj, num_heads=num_heads)
    out = jax.block_until_ready(out)

    ref = attention_ref(x, w_qkv, w_proj, b_proj, num_heads=num_heads)
    assert out.shape == (B, N, C)
    # bf16 MXU inputs (f32 accumulation) -> relaxed tolerance vs f32 reference.
    assert jnp.allclose(out, ref, atol=5e-2, rtol=5e-2), "mismatch vs reference"

    print("KERNEL_OK")
</pallas_src>

<mosaic_0001>
module attributes {stable_mosaic.version = 11 : i64} {
  func.func @_attention_kernel(%arg0: i32, %arg1: memref<2x8x32xf32, #tpu.memory_space<vmem>>, %arg2: memref<32x96xbf16, #tpu.memory_space<vmem>>, %arg3: memref<32x32xbf16, #tpu.memory_space<vmem>>, %arg4: memref<1x32xf32, #tpu.memory_space<vmem>>, %arg5: memref<2x8x32xf32, #tpu.memory_space<vmem>>) attributes {dimension_semantics = [#tpu.dimension_semantics<parallel>], iteration_bounds = array<i64: 1>, scalar_prefetch = 0 : i64, scratch_operands = 0 : i64, tpu.core_type = #tpu.core_type<tc>, window_params = [{transform_indices = @transform_0, window_bounds = array<i64: 2, 8, 32>}, {pipeline_mode = #tpu.pipeline_mode<synchronous>, transform_indices = @transform_1, window_bounds = array<i64: 32, 96>}, {pipeline_mode = #tpu.pipeline_mode<synchronous>, transform_indices = @transform_2, window_bounds = array<i64: 32, 32>}, {pipeline_mode = #tpu.pipeline_mode<synchronous>, transform_indices = @transform_3, window_bounds = array<i64: 1, 32>}, {transform_indices = @transform_4, window_bounds = array<i64: 2, 8, 32>}]} {
    %c0 = arith.constant 0 : index
    %c0_0 = arith.constant 0 : index
    %c0_1 = arith.constant 0 : index
    %0 = vector.load %arg1[%c0, %c0_0, %c0_1] : memref<2x8x32xf32, #tpu.memory_space<vmem>>, vector<2x8x32xf32>
    %1 = vector.shape_cast %0 : vector<2x8x32xf32> to vector<16x32xf32>
    %2 = arith.truncf %1 : vector<16x32xf32> to vector<16x32xbf16>
    %c0_2 = arith.constant 0 : index
    %c0_3 = arith.constant 0 : index
    %3 = vector.load %arg2[%c0_2, %c0_3] : memref<32x96xbf16, #tpu.memory_space<vmem>>, vector<32x96xbf16>
    %c0_4 = arith.constant 0 : index
    %c0_5 = arith.constant 0 : index
    %4 = vector.load %arg3[%c0_4, %c0_5] : memref<32x32xbf16, #tpu.memory_space<vmem>>, vector<32x32xbf16>
    %c0_6 = arith.constant 0 : index
    %c0_7 = arith.constant 0 : index
    %5 = vector.load %arg4[%c0_6, %c0_7] : memref<1x32xf32, #tpu.memory_space<vmem>>, vector<1x32xf32>
    %cst = arith.constant dense<0.000000e+00> : vector<16x96xf32>
    %6 = tpu.matmul %2, %3, %cst {dimension_numbers = #tpu.dot_dimension_numbers<[1], [0], [0], [1], [0, 0, 1, 1], [], []>} : vector<16x32xbf16>, vector<32x96xbf16>, vector<16x96xf32> -> vector<16x96xf32>
    %7 = arith.truncf %6 : vector<16x96xf32> to vector<16x96xbf16>
    %8 = vector.shape_cast %5 : vector<1x32xf32> to vector<1x32xf32>
    %9 = vector.broadcast %8 : vector<1x32xf32> to vector<8x32xf32>
    %10 = vector.extract_strided_slice %7 {offsets = [0, 0], sizes = [8, 8], strides = [1, 1]} : vector<16x96xbf16> to vector<8x8xbf16>
    %11 = vector.extract_strided_slice %7 {offsets = [0, 32], sizes = [8, 8], strides = [1, 1]} : vector<16x96xbf16> to vector<8x8xbf16>
    %12 = vector.extract_strided_slice %7 {offsets = [0, 64], sizes = [8, 8], strides = [1, 1]} : vector<16x96xbf16> to vector<8x8xbf16>
    %cst_8 = arith.constant dense<0.000000e+00> : vector<8x8xf32>
    %13 = tpu.matmul %10, %11, %cst_8 {dimension_numbers = #tpu.dot_dimension_numbers<[1], [1], [0], [0], [0, 0, 1, 0], [], []>} : vector<8x8xbf16>, vector<8x8xbf16>, vector<8x8xf32> -> vector<8x8xf32>
    %cst_9 = arith.constant dense<0xFF800000> : vector<8xf32>
    %14 = vector.multi_reduction <maximumf>, %13, %cst_9 [1] : vector<8x8xf32> to vector<8xf32>
    %15 = vector.shape_cast %14 : vector<8xf32> to vector<8x1xf32>
    %16 = vector.broadcast %15 : vector<8x1xf32> to vector<8x8xf32>
    %17 = arith.subf %13, %16 : vector<8x8xf32>
    %18 = math.exp %17 : vector<8x8xf32>
    %cst_10 = arith.constant dense<0.000000e+00> : vector<8xf32>
    %19 = vector.multi_reduction <add>, %18, %cst_10 [1] : vector<8x8xf32> to vector<8xf32>
    %20 = vector.shape_cast %19 : vector<8xf32> to vector<8x1xf32>
    %21 = tpu.reciprocal %20 {approx = true} : vector<8x1xf32> -> vector<8x1xf32>
    %22 = vector.broadcast %21 : vector<8x1xf32> to vector<8x8xf32>
    %23 = arith.mulf %18, %22 : vector<8x8xf32>
    %24 = arith.truncf %23 : vector<8x8xf32> to vector<8x8xbf16>
    %cst_11 = arith.constant dense<0.000000e+00> : vector<8x8xf32>
    %25 = tpu.matmul %24, %12, %cst_11 {dimension_numbers = #tpu.dot_dimension_numbers<[1], [0], [0], [1], [0, 0, 1, 1], [], []>} : vector<8x8xbf16>, vector<8x8xbf16>, vector<8x8xf32> -> vector<8x8xf32>
    %26 = arith.truncf %25 : vector<8x8xf32> to vector<8x8xbf16>
    %27 = vector.extract_strided_slice %4 {offsets = [0, 0], sizes = [8, 32], strides = [1, 1]} : vector<32x32xbf16> to vector<8x32xbf16>
    %cst_12 = arith.constant dense<0.000000e+00> : vector<8x32xf32>
    %28 = tpu.matmul %26, %27, %cst_12 {dimension_numbers = #tpu.dot_dimension_numbers<[1], [0], [0], [1], [0, 0, 1, 1], [], []>} : vector<8x8xbf16>, vector<8x32xbf16>, vector<8x32xf32> -> vector<8x32xf32>
    %29 = arith.addf %9, %28 : vector<8x32xf32>
    %30 = vector.extract_strided_slice %7 {offsets = [0, 8], sizes = [8, 8], strides = [1, 1]} : vector<16x96xbf16> to vector<8x8xbf16>
    %31 = vector.extract_strided_slice %7 {offsets = [0, 40], sizes = [8, 8], strides = [1, 1]} : vector<16x96xbf16> to vector<8x8xbf16>
    %32 = vector.extract_strided_slice %7 {offsets = [0, 72], sizes = [8, 8], strides = [1, 1]} : vector<16x96xbf16> to vector<8x8xbf16>
    %cst_13 = arith.constant dense<0.000000e+00> : vector<8x8xf32>
    %33 = tpu.matmul %30, %31, %cst_13 {dimension_numbers = #tpu.dot_dimension_numbers<[1], [1], [0], [0], [0, 0, 1, 0], [], []>} : vector<8x8xbf16>, vector<8x8xbf16>, vector<8x8xf32> -> vector<8x8xf32>
    %cst_14 = arith.constant dense<0xFF800000> : vector<8xf32>
    %34 = vector.multi_reduction <maximumf>, %33, %cst_14 [1] : vector<8x8xf32> to vector<8xf32>
    %35 = vector.shape_cast %34 : vector<8xf32> to vector<8x1xf32>
    %36 = vector.broadcast %35 : vector<8x1xf32> to vector<8x8xf32>
    %37 = arith.subf %33, %36 : vector<8x8xf32>
    %38 = math.exp %37 : vector<8x8xf32>
    %cst_15 = arith.constant dense<0.000000e+00> : vector<8xf32>
    %39 = vector.multi_reduction <add>, %38, %cst_15 [1] : vector<8x8xf32> to vector<8xf32>
    %40 = vector.shape_cast %39 : vector<8xf32> to vector<8x1xf32>
    %41 = tpu.reciprocal %40 {approx = true} : vector<8x1xf32> -> vector<8x1xf32>
    %42 = vector.broadcast %41 : vector<8x1xf32> to vector<8x8xf32>
    %43 = arith.mulf %38, %42 : vector<8x8xf32>
    %44 = arith.truncf %43 : vector<8x8xf32> to vector<8x8xbf16>
    %cst_16 = arith.constant dense<0.000000e+00> : vector<8x8xf32>
    %45 = tpu.matmul %44, %32, %cst_16 {dimension_numbers = #tpu.dot_dimension_numbers<[1], [0], [0], [1], [0, 0, 1, 1], [], []>} : vector<8x8xbf16>, vector<8x8xbf16>, vector<8x8xf32> -> vector<8x8xf32>
    %46 = arith.truncf %45 : vector<8x8xf32> to vector<8x8xbf16>
    %47 = vector.extract_strided_slice %4 {offsets = [8, 0], sizes = [8, 32], strides = [1, 1]} : vector<32x32xbf16> to vector<8x32xbf16>
    %cst_17 = arith.constant dense<0.000000e+00> : vector<8x32xf32>
    %48 = tpu.matmul %46, %47, %cst_17 {dimension_numbers = #tpu.dot_dimension_numbers<[1], [0], [0], [1], [0, 0, 1, 1], [], []>} : vector<8x8xbf16>, vector<8x32xbf16>, vector<8x32xf32> -> vector<8x32xf32>
    %49 = arith.addf %29, %48 : vector<8x32xf32>
    %50 = vector.extract_strided_slice %7 {offsets = [0, 16], sizes = [8, 8], strides = [1, 1]} : vector<16x96xbf16> to vector<8x8xbf16>
    %51 = vector.extract_strided_slice %7 {offsets = [0, 48], sizes = [8, 8], strides = [1, 1]} : vector<16x96xbf16> to vector<8x8xbf16>
    %52 = vector.extract_strided_slice %7 {offsets = [0, 80], sizes = [8, 8], strides = [1, 1]} : vector<16x96xbf16> to vector<8x8xbf16>
    %cst_18 = arith.constant dense<0.000000e+00> : vector<8x8xf32>
    %53 = tpu.matmul %50, %51, %cst_18 {dimension_numbers = #tpu.dot_dimension_numbers<[1], [1], [0], [0], [0, 0, 1, 0], [], []>} : vector<8x8xbf16>, vector<8x8xbf16>, vector<8x8xf32> -> vector<8x8xf32>
    %cst_19 = arith.constant dense<0xFF800000> : vector<8xf32>
    %54 = vector.multi_reduction <maximumf>, %53, %cst_19 [1] : vector<8x8xf32> to vector<8xf32>
    %55 = vector.shape_cast %54 : vector<8xf32> to vector<8x1xf32>
    %56 = vector.broadcast %55 : vector<8x1xf32> to vector<8x8xf32>
    %57 = arith.subf %53, %56 : vector<8x8xf32>
    %58 = math.exp %57 : vector<8x8xf32>
    %cst_20 = arith.constant dense<0.000000e+00> : vector<8xf32>
    %59 = vector.multi_reduction <add>, %58, %cst_20 [1] : vector<8x8xf32> to vector<8xf32>
    %60 = vector.shape_cast %59 : vector<8xf32> to vector<8x1xf32>
    %61 = tpu.reciprocal %60 {approx = true} : vector<8x1xf32> -> vector<8x1xf32>
    %62 = vector.broadcast %61 : vector<8x1xf32> to vector<8x8xf32>
    %63 = arith.mulf %58, %62 : vector<8x8xf32>
    %64 = arith.truncf %63 : vector<8x8xf32> to vector<8x8xbf16>
    %cst_21 = arith.constant dense<0.000000e+00> : vector<8x8xf32>
    %65 = tpu.matmul %64, %52, %cst_21 {dimension_numbers = #tpu.dot_dimension_numbers<[1], [0], [0], [1], [0, 0, 1, 1], [], []>} : vector<8x8xbf16>, vector<8x8xbf16>, vector<8x8xf32> -> vector<8x8xf32>
    %66 = arith.truncf %65 : vector<8x8xf32> to vector<8x8xbf16>
    %67 = vector.extract_strided_slice %4 {offsets = [16, 0], sizes = [8, 32], strides = [1, 1]} : vector<32x32xbf16> to vector<8x32xbf16>
    %cst_22 = arith.constant dense<0.000000e+00> : vector<8x32xf32>
    %68 = tpu.matmul %66, %67, %cst_22 {dimension_numbers = #tpu.dot_dimension_numbers<[1], [0], [0], [1], [0, 0, 1, 1], [], []>} : vector<8x8xbf16>, vector<8x32xbf16>, vector<8x32xf32> -> vector<8x32xf32>
    %69 = arith.addf %49, %68 : vector<8x32xf32>
    %70 = vector.extract_strided_slice %7 {offsets = [0, 24], sizes = [8, 8], strides = [1, 1]} : vector<16x96xbf16> to vector<8x8xbf16>
    %71 = vector.extract_strided_slice %7 {offsets = [0, 56], sizes = [8, 8], strides = [1, 1]} : vector<16x96xbf16> to vector<8x8xbf16>
    %72 = vector.extract_strided_slice %7 {offsets = [0, 88], sizes = [8, 8], strides = [1, 1]} : vector<16x96xbf16> to vector<8x8xbf16>
    %cst_23 = arith.constant dense<0.000000e+00> : vector<8x8xf32>
    %73 = tpu.matmul %70, %71, %cst_23 {dimension_numbers = #tpu.dot_dimension_numbers<[1], [1], [0], [0], [0, 0, 1, 0], [], []>} : vector<8x8xbf16>, vector<8x8xbf16>, vector<8x8xf32> -> vector<8x8xf32>
    %cst_24 = arith.constant dense<0xFF800000> : vector<8xf32>
    %74 = vector.multi_reduction <maximumf>, %73, %cst_24 [1] : vector<8x8xf32> to vector<8xf32>
    %75 = vector.shape_cast %74 : vector<8xf32> to vector<8x1xf32>
    %76 = vector.broadcast %75 : vector<8x1xf32> to vector<8x8xf32>
    %77 = arith.subf %73, %76 : vector<8x8xf32>
    %78 = math.exp %77 : vector<8x8xf32>
    %cst_25 = arith.constant dense<0.000000e+00> : vector<8xf32>
    %79 = vector.multi_reduction <add>, %78, %cst_25 [1] : vector<8x8xf32> to vector<8xf32>
    %80 = vector.shape_cast %79 : vector<8xf32> to vector<8x1xf32>
    %81 = tpu.reciprocal %80 {approx = true} : vector<8x1xf32> -> vector<8x1xf32>
    %82 = vector.broadcast %81 : vector<8x1xf32> to vector<8x8xf32>
    %83 = arith.mulf %78, %82 : vector<8x8xf32>
    %84 = arith.truncf %83 : vector<8x8xf32> to vector<8x8xbf16>
    %cst_26 = arith.constant dense<0.000000e+00> : vector<8x8xf32>
    %85 = tpu.matmul %84, %72, %cst_26 {dimension_numbers = #tpu.dot_dimension_numbers<[1], [0], [0], [1], [0, 0, 1, 1], [], []>} : vector<8x8xbf16>, vector<8x8xbf16>, vector<8x8xf32> -> vector<8x8xf32>
    %86 = arith.truncf %85 : vector<8x8xf32> to vector<8x8xbf16>
    %87 = vector.extract_strided_slice %4 {offsets = [24, 0], sizes = [8, 32], strides = [1, 1]} : vector<32x32xbf16> to vector<8x32xbf16>
    %cst_27 = arith.constant dense<0.000000e+00> : vector<8x32xf32>
    %88 = tpu.matmul %86, %87, %cst_27 {dimension_numbers = #tpu.dot_dimension_numbers<[1], [0], [0], [1], [0, 0, 1, 1], [], []>} : vector<8x8xbf16>, vector<8x32xbf16>, vector<8x32xf32> -> vector<8x32xf32>
    %89 = arith.addf %69, %88 : vector<8x32xf32>
    %c0_28 = arith.constant 0 : index
    %c0_29 = arith.constant 0 : index
    %c0_30 = arith.constant 0 : index
    %90 = vector.load %arg5[%c0_28, %c0_29, %c0_30] : memref<2x8x32xf32, #tpu.memory_space<vmem>>, vector<1x8x32xf32>
    %91 = vector.shape_cast %90 : vector<1x8x32xf32> to vector<8x32xf32>
    %92 = vector.shape_cast %89 : vector<8x32xf32> to vector<1x8x32xf32>
    tpu.vector_store %arg5[%c0_28, %c0_29, %c0_30], %92 {strides = array<i32>} : memref<2x8x32xf32, #tpu.memory_space<vmem>>, vector<1x8x32xf32>,
    %93 = vector.extract_strided_slice %7 {offsets = [8, 0], sizes = [8, 8], strides = [1, 1]} : vector<16x96xbf16> to vector<8x8xbf16>
    %94 = vector.extract_strided_slice %7 {offsets = [8, 32], sizes = [8, 8], strides = [1, 1]} : vector<16x96xbf16> to vector<8x8xbf16>
    %95 = vector.extract_strided_slice %7 {offsets = [8, 64], sizes = [8, 8], strides = [1, 1]} : vector<16x96xbf16> to vector<8x8xbf16>
    %cst_31 = arith.constant dense<0.000000e+00> : vector<8x8xf32>
    %96 = tpu.matmul %93, %94, %cst_31 {dimension_numbers = #tpu.dot_dimension_numbers<[1], [1], [0], [0], [0, 0, 1, 0], [], []>} : vector<8x8xbf16>, vector<8x8xbf16>, vector<8x8xf32> -> vector<8x8xf32>
    %cst_32 = arith.constant dense<0xFF800000> : vector<8xf32>
    %97 = vector.multi_reduction <maximumf>, %96, %cst_32 [1] : vector<8x8xf32> to vector<8xf32>
    %98 = vector.shape_cast %97 : vector<8xf32> to vector<8x1xf32>
    %99 = vector.broadcast %98 : vector<8x1xf32> to vector<8x8xf32>
    %100 = arith.subf %96, %99 : vector<8x8xf32>
    %101 = math.exp %100 : vector<8x8xf32>
    %cst_33 = arith.constant dense<0.000000e+00> : vector<8xf32>
    %102 = vector.multi_reduction <add>, %101, %cst_33 [1] : vector<8x8xf32> to vector<8xf32>
    %103 = vector.shape_cast %102 : vector<8xf32> to vector<8x1xf32>
    %104 = tpu.reciprocal %103 {approx = true} : vector<8x1xf32> -> vector<8x1xf32>
    %105 = vector.broadcast %104 : vector<8x1xf32> to vector<8x8xf32>
    %106 = arith.mulf %101, %105 : vector<8x8xf32>
    %107 = arith.truncf %106 : vector<8x8xf32> to vector<8x8xbf16>
    %cst_34 = arith.constant dense<0.000000e+00> : vector<8x8xf32>
    %108 = tpu.matmul %107, %95, %cst_34 {dimension_numbers = #tpu.dot_dimension_numbers<[1], [0], [0], [1], [0, 0, 1, 1], [], []>} : vector<8x8xbf16>, vector<8x8xbf16>, vector<8x8xf32> -> vector<8x8xf32>
    %109 = arith.truncf %108 : vector<8x8xf32> to vector<8x8xbf16>
    %110 = vector.extract_strided_slice %4 {offsets = [0, 0], sizes = [8, 32], strides = [1, 1]} : vector<32x32xbf16> to vector<8x32xbf16>
    %cst_35 = arith.constant dense<0.000000e+00> : vector<8x32xf32>
    %111 = tpu.matmul %109, %110, %cst_35 {dimension_numbers = #tpu.dot_dimension_numbers<[1], [0], [0], [1], [0, 0, 1, 1], [], []>} : vector<8x8xbf16>, vector<8x32xbf16>, vector<8x32xf32> -> vector<8x32xf32>
    %112 = arith.addf %9, %111 : vector<8x32xf32>
    %113 = vector.extract_strided_slice %7 {offsets = [8, 8], sizes = [8, 8], strides = [1, 1]} : vector<16x96xbf16> to vector<8x8xbf16>
    %114 = vector.extract_strided_slice %7 {offsets = [8, 40], sizes = [8, 8], strides = [1, 1]} : vector<16x96xbf16> to vector<8x8xbf16>
    %115 = vector.extract_strided_slice %7 {offsets = [8, 72], sizes = [8, 8], strides = [1, 1]} : vector<16x96xbf16> to vector<8x8xbf16>
    %cst_36 = arith.constant dense<0.000000e+00> : vector<8x8xf32>
    %116 = tpu.matmul %113, %114, %cst_36 {dimension_numbers = #tpu.dot_dimension_numbers<[1], [1], [0], [0], [0, 0, 1, 0], [], []>} : vector<8x8xbf16>, vector<8x8xbf16>, vector<8x8xf32> -> vector<8x8xf32>
    %cst_37 = arith.constant dense<0xFF800000> : vector<8xf32>
    %117 = vector.multi_reduction <maximumf>, %116, %cst_37 [1] : vector<8x8xf32> to vector<8xf32>
    %118 = vector.shape_cast %117 : vector<8xf32> to vector<8x1xf32>
    %119 = vector.broadcast %118 : vector<8x1xf32> to vector<8x8xf32>
    %120 = arith.subf %116, %119 : vector<8x8xf32>
    %121 = math.exp %120 : vector<8x8xf32>
    %cst_38 = arith.constant dense<0.000000e+00> : vector<8xf32>
    %122 = vector.multi_reduction <add>, %121, %cst_38 [1] : vector<8x8xf32> to vector<8xf32>
    %123 = vector.shape_cast %122 : vector<8xf32> to vector<8x1xf32>
    %124 = tpu.reciprocal %123 {approx = true} : vector<8x1xf32> -> vector<8x1xf32>
    %125 = vector.broadcast %124 : vector<8x1xf32> to vector<8x8xf32>
    %126 = arith.mulf %121, %125 : vector<8x8xf32>
    %127 = arith.truncf %126 : vector<8x8xf32> to vector<8x8xbf16>
    %cst_39 = arith.constant dense<0.000000e+00> : vector<8x8xf32>
    %128 = tpu.matmul %127, %115, %cst_39 {dimension_numbers = #tpu.dot_dimension_numbers<[1], [0], [0], [1], [0, 0, 1, 1], [], []>} : vector<8x8xbf16>, vector<8x8xbf16>, vector<8x8xf32> -> vector<8x8xf32>
    %129 = arith.truncf %128 : vector<8x8xf32> to vector<8x8xbf16>
    %130 = vector.extract_strided_slice %4 {offsets = [8, 0], sizes = [8, 32], strides = [1, 1]} : vector<32x32xbf16> to vector<8x32xbf16>
    %cst_40 = arith.constant dense<0.000000e+00> : vector<8x32xf32>
    %131 = tpu.matmul %129, %130, %cst_40 {dimension_numbers = #tpu.dot_dimension_numbers<[1], [0], [0], [1], [0, 0, 1, 1], [], []>} : vector<8x8xbf16>, vector<8x32xbf16>, vector<8x32xf32> -> vector<8x32xf32>
    %132 = arith.addf %112, %131 : vector<8x32xf32>
    %133 = vector.extract_strided_slice %7 {offsets = [8, 16], sizes = [8, 8], strides = [1, 1]} : vector<16x96xbf16> to vector<8x8xbf16>
    %134 = vector.extract_strided_slice %7 {offsets = [8, 48], sizes = [8, 8], strides = [1, 1]} : vector<16x96xbf16> to vector<8x8xbf16>
    %135 = vector.extract_strided_slice %7 {offsets = [8, 80], sizes = [8, 8], strides = [1, 1]} : vector<16x96xbf16> to vector<8x8xbf16>
    %cst_41 = arith.constant dense<0.000000e+00> : vector<8x8xf32>
    %136 = tpu.matmul %133, %134, %cst_41 {dimension_numbers = #tpu.dot_dimension_numbers<[1], [1], [0], [0], [0, 0, 1, 0], [], []>} : vector<8x8xbf16>, vector<8x8xbf16>, vector<8x8xf32> -> vector<8x8xf32>
    %cst_42 = arith.constant dense<0xFF800000> : vector<8xf32>
    %137 = vector.multi_reduction <maximumf>, %136, %cst_42 [1] : vector<8x8xf32> to vector<8xf32>
    %138 = vector.shape_cast %137 : vector<8xf32> to vector<8x1xf32>
    %139 = vector.broadcast %138 : vector<8x1xf32> to vector<8x8xf32>
    %140 = arith.subf %136, %139 : vector<8x8xf32>
    %141 = math.exp %140 : vector<8x8xf32>
    %cst_43 = arith.constant dense<0.000000e+00> : vector<8xf32>
    %142 = vector.multi_reduction <add>, %141, %cst_43 [1] : vector<8x8xf32> to vector<8xf32>
    %143 = vector.shape_cast %142 : vector<8xf32> to vector<8x1xf32>
    %144 = tpu.reciprocal %143 {approx = true} : vector<8x1xf32> -> vector<8x1xf32>
    %145 = vector.broadcast %144 : vector<8x1xf32> to vector<8x8xf32>
    %146 = arith.mulf %141, %145 : vector<8x8xf32>
    %147 = arith.truncf %146 : vector<8x8xf32> to vector<8x8xbf16>
    %cst_44 = arith.constant dense<0.000000e+00> : vector<8x8xf32>
    %148 = tpu.matmul %147, %135, %cst_44 {dimension_numbers = #tpu.dot_dimension_numbers<[1], [0], [0], [1], [0, 0, 1, 1], [], []>} : vector<8x8xbf16>, vector<8x8xbf16>, vector<8x8xf32> -> vector<8x8xf32>
    %149 = arith.truncf %148 : vector<8x8xf32> to vector<8x8xbf16>
    %150 = vector.extract_strided_slice %4 {offsets = [16, 0], sizes = [8, 32], strides = [1, 1]} : vector<32x32xbf16> to vector<8x32xbf16>
    %cst_45 = arith.constant dense<0.000000e+00> : vector<8x32xf32>
    %151 = tpu.matmul %149, %150, %cst_45 {dimension_numbers = #tpu.dot_dimension_numbers<[1], [0], [0], [1], [0, 0, 1, 1], [], []>} : vector<8x8xbf16>, vector<8x32xbf16>, vector<8x32xf32> -> vector<8x32xf32>
    %152 = arith.addf %132, %151 : vector<8x32xf32>
    %153 = vector.extract_strided_slice %7 {offsets = [8, 24], sizes = [8, 8], strides = [1, 1]} : vector<16x96xbf16> to vector<8x8xbf16>
    %154 = vector.extract_strided_slice %7 {offsets = [8, 56], sizes = [8, 8], strides = [1, 1]} : vector<16x96xbf16> to vector<8x8xbf16>
    %155 = vector.extract_strided_slice %7 {offsets = [8, 88], sizes = [8, 8], strides = [1, 1]} : vector<16x96xbf16> to vector<8x8xbf16>
    %cst_46 = arith.constant dense<0.000000e+00> : vector<8x8xf32>
    %156 = tpu.matmul %153, %154, %cst_46 {dimension_numbers = #tpu.dot_dimension_numbers<[1], [1], [0], [0], [0, 0, 1, 0], [], []>} : vector<8x8xbf16>, vector<8x8xbf16>, vector<8x8xf32> -> vector<8x8xf32>
    %cst_47 = arith.constant dense<0xFF800000> : vector<8xf32>
    %157 = vector.multi_reduction <maximumf>, %156, %cst_47 [1] : vector<8x8xf32> to vector<8xf32>
    %158 = vector.shape_cast %157 : vector<8xf32> to vector<8x1xf32>
    %159 = vector.broadcast %158 : vector<8x1xf32> to vector<8x8xf32>
    %160 = arith.subf %156, %159 : vector<8x8xf32>
    %161 = math.exp %160 : vector<8x8xf32>
    %cst_48 = arith.constant dense<0.000000e+00> : vector<8xf32>
    %162 = vector.multi_reduction <add>, %161, %cst_48 [1] : vector<8x8xf32> to vector<8xf32>
    %163 = vector.shape_cast %162 : vector<8xf32> to vector<8x1xf32>
    %164 = tpu.reciprocal %163 {approx = true} : vector<8x1xf32> -> vector<8x1xf32>
    %165 = vector.broadcast %164 : vector<8x1xf32> to vector<8x8xf32>
    %166 = arith.mulf %161, %165 : vector<8x8xf32>
    %167 = arith.truncf %166 : vector<8x8xf32> to vector<8x8xbf16>
    %cst_49 = arith.constant dense<0.000000e+00> : vector<8x8xf32>
    %168 = tpu.matmul %167, %155, %cst_49 {dimension_numbers = #tpu.dot_dimension_numbers<[1], [0], [0], [1], [0, 0, 1, 1], [], []>} : vector<8x8xbf16>, vector<8x8xbf16>, vector<8x8xf32> -> vector<8x8xf32>
    %169 = arith.truncf %168 : vector<8x8xf32> to vector<8x8xbf16>
    %170 = vector.extract_strided_slice %4 {offsets = [24, 0], sizes = [8, 32], strides = [1, 1]} : vector<32x32xbf16> to vector<8x32xbf16>
    %cst_50 = arith.constant dense<0.000000e+00> : vector<8x32xf32>
    %171 = tpu.matmul %169, %170, %cst_50 {dimension_numbers = #tpu.dot_dimension_numbers<[1], [0], [0], [1], [0, 0, 1, 1], [], []>} : vector<8x8xbf16>, vector<8x32xbf16>, vector<8x32xf32> -> vector<8x32xf32>
    %172 = arith.addf %152, %171 : vector<8x32xf32>
    %c1 = arith.constant 1 : index
    %c0_51 = arith.constant 0 : index
    %c0_52 = arith.constant 0 : index
    %173 = vector.load %arg5[%c1, %c0_51, %c0_52] : memref<2x8x32xf32, #tpu.memory_space<vmem>>, vector<1x8x32xf32>
    %174 = vector.shape_cast %173 : vector<1x8x32xf32> to vector<8x32xf32>
    %175 = vector.shape_cast %172 : vector<8x32xf32> to vector<1x8x32xf32>
    tpu.vector_store %arg5[%c1, %c0_51, %c0_52], %175 {strides = array<i32>} : memref<2x8x32xf32, #tpu.memory_space<vmem>>, vector<1x8x32xf32>,
    return
  }
  func.func @transform_0(%arg0: i32) -> (i32, i32, i32) {
    %c0_i32 = arith.constant 0 : i32
    %c0_i32_0 = arith.constant 0 : i32
    %c0_i32_1 = arith.constant 0 : i32
    return %arg0, %c0_i32, %c0_i32_0 : i32, i32, i32
  }
  func.func @transform_1(%arg0: i32) -> (i32, i32) {
    %c0_i32 = arith.constant 0 : i32
    %c0_i32_0 = arith.constant 0 : i32
    %c0_i32_1 = arith.constant 0 : i32
    return %c0_i32, %c0_i32_0 : i32, i32
  }
  func.func @transform_2(%arg0: i32) -> (i32, i32) {
    %c0_i32 = arith.constant 0 : i32
    %c0_i32_0 = arith.constant 0 : i32
    %c0_i32_1 = arith.constant 0 : i32
    return %c0_i32, %c0_i32_0 : i32, i32
  }
  func.func @transform_3(%arg0: i32) -> (i32, i32) {
    %c0_i32 = arith.constant 0 : i32
    %c0_i32_0 = arith.constant 0 : i32
    %c0_i32_1 = arith.constant 0 : i32
    return %c0_i32, %c0_i32_0 : i32, i32
  }
  func.func @transform_4(%arg0: i32) -> (i32, i32, i32) {
    %c0_i32 = arith.constant 0 : i32
    %c0_i32_0 = arith.constant 0 : i32
    %c0_i32_1 = arith.constant 0 : i32
    return %arg0, %c0_i32, %c0_i32_0 : i32, i32, i32
  }
}

</mosaic_0001>

<llo_original>
// kernel: tpu_custom_call.1
$region0: #{tpu_custom_call.1}
  #allocation0 [shape = 'u32[]', space=smem, size = 0x4, offset = 0x4, fixed_abs, tag = 'smem constant byte address 0x4 - core index']
  #allocation1 [shape = 'u32[144,128]{1,0:T(1,128)}', space=vmem, size = 0x12000, scoped, tag = 'internal scratch']
  %s0 = inlined_call_operand.hbm [shape: f32[2,8,32], index: 0, kind: input, shape index: {}]
  %s1 = inlined_call_operand.hbm [shape: bf16[32,96], index: 1, kind: input, shape index: {}]
  %s2 = inlined_call_operand.hbm [shape: bf16[32,32], index: 2, kind: input, shape index: {}]
  %s3 = inlined_call_operand.hbm [shape: f32[1,32], index: 3, kind: input, shape index: {}]
  %s4 = inlined_call_operand.hbm [shape: f32[2,8,32], index: 4, kind: output, shape index: {}]
  %s5 = sld [smem:[#allocation0]]
  $region42: #{tpu_custom_call.1} parent=0
    _
  %s7 = ssub.s32 1, %s5
  %s8 = scalar_select 0, %s7, %s5
  $region1: #{tpu_custom_call.1} parent=0
    #allocation2 [shape = 'u8[8192]{0}', space=vmem, size = 0x2000, scoped, tag = 'input window, operand 0, single buffered']
    #allocation3 [shape = 's32[1]{0}', space=sflag, size = 0x4, scoped, tag = 'scoped memory for tpu_custom_call.1']
    #allocation4 [shape = 's32[1]{0}', space=sflag, size = 0x4, scoped, tag = 'scoped memory for tpu_custom_call.1']
    #allocation5 [shape = 'u8[8192]{0}', space=vmem, size = 0x2000, scoped, tag = 'input window, operand 1, single buffered']
    #allocation6 [shape = 's32[1]{0}', space=sflag, size = 0x4, scoped, tag = 'scoped memory for tpu_custom_call.1']
    #allocation7 [shape = 'u8[8192]{0}', space=vmem, size = 0x2000, scoped, tag = 'input window, operand 2, single buffered']
    #allocation8 [shape = 'u8[512]{0}', space=vmem, size = 0x400, scoped, tag = 'input window, operand 3, single buffered']
    #allocation9 [shape = 's32[1]{0}', space=sflag, size = 0x4, scoped, tag = 'scoped memory for tpu_custom_call.1']
    #allocation10 [shape = 'u8[8192]{0}', space=vmem, size = 0x2000, scoped, tag = 'output window, operand 0, single buffered']
    %9 = vsyncpa [#allocation3], 0
    %10 = vsyncpa [#allocation6], 0
    %11 = vsyncpa [#allocation9], 0
    %12 = vsyncpa [#allocation4], 0
    // Predicated region
    $region2: #{tpu_custom_call.1} parent=1 // pred_check
      _
    $region3: #{tpu_custom_call.1} parent=1 // pred_check_branch
      %14 = sbr.rel (0) target = $region5
    $region4: #{tpu_custom_call.1} parent=1 // pred_region
      %s16 = ssub.s32 256, 256
      %17 = vsyncadd [#allocation3], %s16
      %s18 = sshll.u32 [#allocation2], 4
      %s19 = int_to_ptr.vmem [resolvable:$true] %s18
      %24 = dma.hbm_to_vmem [thread:$0]  %s0, 256, %s19, [#allocation3], 128, 128, 8
    $region5: #{tpu_custom_call.1} parent=1 // pred_fallthru
      _
    // Predicated region
    $region6: #{tpu_custom_call.1} parent=1 // pred_check
      _
    $region7: #{tpu_custom_call.1} parent=1 // pred_check_branch
      %26 = sbr.rel (0) target = $region9
    $region8: #{tpu_custom_call.1} parent=1 // pred_region
      %s28 = ssub.s32 256, 256
      %29 = vsyncadd [#allocation6], %s28
      %s30 = sshll.u32 [#allocation5], 4
      %s31 = int_to_ptr.vmem [resolvable:$true] %s30
      %36 = dma.hbm_to_vmem [thread:$0]  %s1, 256, %s31, [#allocation6], 64, 64, 4
    $region9: #{tpu_custom_call.1} parent=1 // pred_fallthru
      _
    // Predicated region
    $region10: #{tpu_custom_call.1} parent=1 // pred_check
      _
    $region11: #{tpu_custom_call.1} parent=1 // pred_check_branch
      %38 = sbr.rel (0) target = $region13
    $region12: #{tpu_custom_call.1} parent=1 // pred_region
      %s40 = ssub.s32 256, 256
      %41 = vsyncadd [#allocation6], %s40
      %s42 = sshll.u32 [#allocation7], 4
      %s43 = int_to_ptr.vmem [resolvable:$true] %s42
      %48 = dma.hbm_to_vmem [thread:$0]  %s2, 256, %s43, [#allocation6], 64, 64, 4
    $region13: #{tpu_custom_call.1} parent=1 // pred_fallthru
      _
    // Predicated region
    $region14: #{tpu_custom_call.1} parent=1 // pred_check
      _
    $region15: #{tpu_custom_call.1} parent=1 // pred_check_branch
      %50 = sbr.rel (0) target = $region17
    $region16: #{tpu_custom_call.1} parent=1 // pred_region
      %s52 = ssub.s32 16, 16
      %53 = vsyncadd [#allocation9], %s52
      %s55 = sshll.u32 [#allocation8], 4
      %s56 = int_to_ptr.vmem [resolvable:$true] %s55
      %58 = dma.hbm_to_vmem [thread:$0]  %s3, 16, %s56, [#allocation9]
    $region17: #{tpu_custom_call.1} parent=1 // pred_fallthru
      _
    // Predicated region
    $region18: #{tpu_custom_call.1} parent=1 // pred_check
      _
    $region19: #{tpu_custom_call.1} parent=1 // pred_check_branch
      %60 = sbr.rel (0) target = $region21
    $region20: #{tpu_custom_call.1} parent=1 // pred_region
      %61 = dma.done [#allocation3], 256
    $region21: #{tpu_custom_call.1} parent=1 // pred_fallthru
      _
    // Predicated region
    $region22: #{tpu_custom_call.1} parent=1 // pred_check
      _
    $region23: #{tpu_custom_call.1} parent=1 // pred_check_branch
      %63 = sbr.rel (0) target = $region25
    $region24: #{tpu_custom_call.1} parent=1 // pred_region
      %64 = dma.done [#allocation6], 256
    $region25: #{tpu_custom_call.1} parent=1 // pred_fallthru
      _
    // Predicated region
    $region26: #{tpu_custom_call.1} parent=1 // pred_check
      _
    $region27: #{tpu_custom_call.1} parent=1 // pred_check_branch
      %66 = sbr.rel (0) target = $region29
    $region28: #{tpu_custom_call.1} parent=1 // pred_region
      %67 = dma.done [#allocation6], 256
    $region29: #{tpu_custom_call.1} parent=1 // pred_fallthru
      _
    // Predicated region
    $region30: #{tpu_custom_call.1} parent=1 // pred_check
      _
    $region31: #{tpu_custom_call.1} parent=1 // pred_check_branch
      %69 = sbr.rel (0) target = $region33
    $region32: #{tpu_custom_call.1} parent=1 // pred_region
      %70 = dma.done [#allocation9], 16
    $region33: #{tpu_custom_call.1} parent=1 // pred_fallthru
      _
    %v72 = vld [vmem:[#allocation2] sm:$0xff]
    %v73 = vld [vmem:[#allocation2 + $0x8] sm:$0xff]
    %v74 = vpack.c.bf16 %v73, %v72
    %v75 = vld [vmem:[#allocation5] sm:$0xf]
    %v76 = vld [vmem:[#allocation5 + $0x4] sm:$0xf]
    %v77 = vld [vmem:[#allocation5 + $0x8] sm:$0xf]
    %v78 = vld [vmem:[#allocation5 + $0xc] sm:$0xf]
    %v79 = vld [vmem:[#allocation7] sm:$0xf]
    %v80 = vld [vmem:[#allocation7 + $0x4] sm:$0xf]
    %v81 = vld [vmem:[#allocation7 + $0x8] sm:$0xf]
    %v82 = vld [vmem:[#allocation7 + $0xc] sm:$0xf]
    %v83 = vld [vmem:[#allocation8] sm:$0x1]
    %v88 = vunpack.c.l.b16 %v75
    %v89 = vunpack.c.l.b16 %v76
    %v90 = vunpack.c.l.b16 %v77
    %v91 = vunpack.c.l.b16 %v78
    %v92 = vpack.c.b16 %v89, %v88
    %v93 = vpack.c.b16 %v91, %v90
    %vm96 = vcmask 261120
    %v98 = vsel %vm96, %v74, 0
    %100 = vmatprep.subr.bf16.mxu0 0
    %101 = vmatpush1.bf16.msra.mxu0 %v92
    %102 = vmatprep.subr.bf16.mxu0 0
    %103 = vmatpush1.bf16.msra.mxu0 %v93
    %104 = vmatprep.subr.bf16.mxu0 0
    %105 = vmatpush1.bf16.msra.mxu0 0
    %106 = vmatprep.subr.bf16.mxu0 0
    %107 = vmatpush1.bf16.msra.mxu0 0
    %108 = vmatprep.subr.bf16.mxu0 0
    %109 = vmatpush1.bf16.msra.mxu0 0
    %110 = vmatprep.subr.bf16.mxu0 0
    %111 = vmatpush1.bf16.msra.mxu0 0
    %112 = vmatprep.subr.bf16.mxu0 0
    %113 = vmatpush1.bf16.msra.mxu0 0
    %114 = vmatprep.subr.bf16.mxu0 0
    %115 = vmatpush1.bf16.msra.mxu0 0
    %116 = vmatprep.subr.bf16.mxu0 0
    %117 = vmatpush1.bf16.msra.mxu0 0
    %118 = vmatprep.subr.bf16.mxu0 0
    %119 = vmatpush1.bf16.msra.mxu0 0
    %120 = vmatprep.subr.bf16.mxu0 0
    %121 = vmatpush1.bf16.msra.mxu0 0
    %122 = vmatprep.subr.bf16.mxu0 0
    %123 = vmatpush1.bf16.msra.mxu0 0
    %124 = vmatprep.subr.bf16.mxu0 0
    %125 = vmatpush1.bf16.msra.mxu0 0
    %126 = vmatprep.subr.bf16.mxu0 0
    %127 = vmatpush1.bf16.msra.mxu0 0
    %128 = vmatprep.subr.bf16.mxu0 0
    %129 = vmatpush1.bf16.msra.mxu0 0
    %130 = vmatprep.subr.bf16.mxu0 0
    %131 = vmatpush1.bf16.msra.mxu0 0
    %132 = vmatprep.mubr.bf16.mxu0 0
    %133 = vmatmul.mubr.bf16.gmra.mrb[0].mxu0 %v98
    %v134 = vpop.f32.mrb[0].mxu0
    %v135 = vadd.f32 0.0, %v134
    %v136 = vpop.f32.mrb[0].mxu0
    %v137 = vpop.f32.mrb[0].mxu0
    %v138 = vadd.f32 0.0, %v137
    %v139 = vpop.f32.mrb[0].mxu0
    %140 = vdwg.mxu0
    %v141 = vpack.c.bf16 %v138, %v135
    %v143 = vlaneseq
    %v144 = vshrl.u32 %v143, 7
    %v145 = vsub.s32 0, %v144
    %v146 = vrot.slane %v83, %v145
    %149 = vrot.lane.b32.xlu0 %v141, 96
    %v150 = vpop.permute.xlu0 %149
    %vm151 = vcmask 64512
    %v153 = vsel %vm151, %v141, 0
    %v156 = vsel %vm151, %v150, 0
    %158 = vmatprep.subr.bf16.mxu0 0
    %159 = vmatpush1.bf16.xpose.msra.mxu0 %v156
    %160 = vmatprep.subr.bf16.mxu0 0
    %161 = vmatpush1.bf16.xpose.msra.mxu0 0
    %162 = vmatprep.subr.bf16.mxu0 0
    %163 = vmatpush1.bf16.xpose.msra.mxu0 0
    %164 = vmatprep.subr.bf16.mxu0 0
    %165 = vmatpush1.bf16.xpose.msra.mxu0 0
    %166 = vmatprep.subr.bf16.mxu0 0
    %167 = vmatpush1.bf16.xpose.msra.mxu0 0
    %168 = vmatprep.subr.bf16.mxu0 0
    %169 = vmatpush1.bf16.xpose.msra.mxu0 0
    %170 = vmatprep.subr.bf16.mxu0 0
    %171 = vmatpush1.bf16.xpose.msra.mxu0 0
    %172 = vmatprep.subr.bf16.mxu0 0
    %173 = vmatpush1.bf16.xpose.msra.mxu0 0
    %174 = vmatprep.subr.bf16.mxu0 0
    %175 = vmatpush1.bf16.xpose.msra.mxu0 0
    %176 = vmatprep.subr.bf16.mxu0 0
    %177 = vmatpush1.bf16.xpose.msra.mxu0 0
    %178 = vmatprep.subr.bf16.mxu0 0
    %179 = vmatpush1.bf16.xpose.msra.mxu0 0
    %180 = vmatprep.subr.bf16.mxu0 0
    %181 = vmatpush1.bf16.xpose.msra.mxu0 0
    %182 = vmatprep.subr.bf16.mxu0 0
    %183 = vmatpush1.bf16.xpose.msra.mxu0 0
    %184 = vmatprep.subr.bf16.mxu0 0
    %185 = vmatpush1.bf16.xpose.msra.mxu0 0
    %186 = vmatprep.subr.bf16.mxu0 0
    %187 = vmatpush1.bf16.xpose.msra.mxu0 0
    %188 = vmatprep.subr.bf16.mxu0 0
    %189 = vmatpush1.bf16.xpose.msra.mxu0 0
    %190 = vmatprep.mubr.bf16.mxu0 0
    %191 = vmatmul.mubr.bf16.gmra.mrb[0].mxu0 %v153
    %v192 = vpop.f32.mrb[0].mxu0
    %v193 = vadd.f32 0.0, %v192
    %v194 = vpop.f32.mrb[0].mxu0
    %v195 = vpop.f32.mrb[0].mxu0
    %v196 = vpop.f32.mrb[0].mxu0
    %197 = vdwg.mxu0
    %v198 = vsel %vm151, %v193, -inf
    %199 = vmax.xlane.f32.xlu0 %v198
    %v200 = vpop.xlane.xlu0 %199
    %v201 = vsub.f32 %v193, %v200
    %v202 = vmul.f32 %v201, 1.442695
    %v203 = vpow.pop %v202
    %v204 = vsel %vm151, %v203, 0.0
    %205 = vadd.xlane.f32.xlu0 %v204
    %v206 = vpop.xlane.xlu0 %205
    %v207 = vrcp.pop %v206
    %v208 = vmul.f32 %v203, %v207
    %v209 = vpack.c.bf16 %v208, %v208
    %210 = vrot.lane.b32.xlu0 %v141, 64
    %v211 = vpop.permute.xlu0 %210
    %v213 = vsel %vm151, %v209, 0
    %vm215 = vcmask 1043456
    %v217 = vsel %vm215, %v211, 0
    %219 = vmatprep.subr.bf16.mxu0 0
    %220 = vmatpush1.bf16.msra.mxu0 %v217
    %221 = vmatprep.subr.bf16.mxu0 0
    %222 = vmatpush1.bf16.msra.mxu0 0
    %223 = vmatprep.subr.bf16.mxu0 0
    %224 = vmatpush1.bf16.msra.mxu0 0
    %225 = vmatprep.subr.bf16.mxu0 0
    %226 = vmatpush1.bf16.msra.mxu0 0
    %227 = vmatprep.subr.bf16.mxu0 0
    %228 = vmatpush1.bf16.msra.mxu0 0
    %229 = vmatprep.subr.bf16.mxu0 0
    %230 = vmatpush1.bf16.msra.mxu0 0
    %231 = vmatprep.subr.bf16.mxu0 0
    %232 = vmatpush1.bf16.msra.mxu0 0
    %233 = vmatprep.subr.bf16.mxu0 0
    %234 = vmatpush1.bf16.msra.mxu0 0
    %235 = vmatprep.subr.bf16.mxu0 0
    %236 = vmatpush1.bf16.msra.mxu0 0
    %237 = vmatprep.subr.bf16.mxu0 0
    %238 = vmatpush1.bf16.msra.mxu0 0
    %239 = vmatprep.subr.bf16.mxu0 0
    %240 = vmatpush1.bf16.msra.mxu0 0
    %241 = vmatprep.subr.bf16.mxu0 0
    %242 = vmatpush1.bf16.msra.mxu0 0
    %243 = vmatprep.subr.bf16.mxu0 0
    %244 = vmatpush1.bf16.msra.mxu0 0
    %245 = vmatprep.subr.bf16.mxu0 0
    %246 = vmatpush1.bf16.msra.mxu0 0
    %247 = vmatprep.subr.bf16.mxu0 0
    %248 = vmatpush1.bf16.msra.mxu0 0
    %249 = vmatprep.subr.bf16.mxu0 0
    %250 = vmatpush1.bf16.msra.mxu0 0
    %251 = vmatprep.mubr.bf16.mxu0 0
    %252 = vmatmul.mubr.bf16.gmra.mrb[0].mxu0 %v213
    %v253 = vpop.f32.mrb[0].mxu0
    %v254 = vadd.f32 0.0, %v253
    %v255 = vpop.f32.mrb[0].mxu0
    %v256 = vpop.f32.mrb[0].mxu0
    %v257 = vpop.f32.mrb[0].mxu0
    %258 = vdwg.mxu0
    %v259 = vpack.c.bf16 %v254, %v254
    %v261 = vsel %vm151, %v259, 0
    %v264 = vsel %vm215, %v79, 0
    %266 = vmatprep.subr.bf16.mxu0 0
    %267 = vmatpush1.bf16.msra.mxu0 %v264
    %268 = vmatprep.subr.bf16.mxu0 0
    %269 = vmatpush1.bf16.msra.mxu0 0
    %270 = vmatprep.subr.bf16.mxu0 0
    %271 = vmatpush1.bf16.msra.mxu0 0
    %272 = vmatprep.subr.bf16.mxu0 0
    %273 = vmatpush1.bf16.msra.mxu0 0
    %274 = vmatprep.subr.bf16.mxu0 0
    %275 = vmatpush1.bf16.msra.mxu0 0
    %276 = vmatprep.subr.bf16.mxu0 0
    %277 = vmatpush1.bf16.msra.mxu0 0
    %278 = vmatprep.subr.bf16.mxu0 0
    %279 = vmatpush1.bf16.msra.mxu0 0
    %280 = vmatprep.subr.bf16.mxu0 0
    %281 = vmatpush1.bf16.msra.mxu0 0
    %282 = vmatprep.subr.bf16.mxu0 0
    %283 = vmatpush1.bf16.msra.mxu0 0
    %284 = vmatprep.subr.bf16.mxu0 0
    %285 = vmatpush1.bf16.msra.mxu0 0
    %286 = vmatprep.subr.bf16.mxu0 0
    %287 = vmatpush1.bf16.msra.mxu0 0
    %288 = vmatprep.subr.bf16.mxu0 0
    %289 = vmatpush1.bf16.msra.mxu0 0
    %290 = vmatprep.subr.bf16.mxu0 0
    %291 = vmatpush1.bf16.msra.mxu0 0
    %292 = vmatprep.subr.bf16.mxu0 0
    %293 = vmatpush1.bf16.msra.mxu0 0
    %294 = vmatprep.subr.bf16.mxu0 0
    %295 = vmatpush1.bf16.msra.mxu0 0
    %296 = vmatprep.subr.bf16.mxu0 0
    %297 = vmatpush1.bf16.msra.mxu0 0
    %298 = vmatprep.mubr.bf16.mxu0 0
    %299 = vmatmul.mubr.bf16.gmra.mrb[0].mxu0 %v261
    %v300 = vpop.f32.mrb[0].mxu0
    %v301 = vadd.f32 0.0, %v300
    %v302 = vpop.f32.mrb[0].mxu0
    %v303 = vpop.f32.mrb[0].mxu0
    %v304 = vpop.f32.mrb[0].mxu0
    %305 = vdwg.mxu0
    %v306 = vadd.f32 %v146, %v301
    %307 = vrot.lane.b32.xlu0 %v141, 120
    %v308 = vpop.permute.xlu0 %307
    %309 = vrot.lane.b32.xlu0 %v141, 88
    %v310 = vpop.permute.xlu0 %309
    %v312 = vsel %vm151, %v308, 0
    %v315 = vsel %vm151, %v310, 0
    %317 = vmatprep.subr.bf16.mxu0 0
    %318 = vmatpush1.bf16.xpose.msra.mxu0 %v315
    %319 = vmatprep.subr.bf16.mxu0 0
    %320 = vmatpush1.bf16.xpose.msra.mxu0 0
    %321 = vmatprep.subr.bf16.mxu0 0
    %322 = vmatpush1.bf16.xpose.msra.mxu0 0
    %323 = vmatprep.subr.bf16.mxu0 0
    %324 = vmatpush1.bf16.xpose.msra.mxu0 0
    %325 = vmatprep.subr.bf16.mxu0 0
    %326 = vmatpush1.bf16.xpose.msra.mxu0 0
    %327 = vmatprep.subr.bf16.mxu0 0
    %328 = vmatpush1.bf16.xpose.msra.mxu0 0
    %329 = vmatprep.subr.bf16.mxu0 0
    %330 = vmatpush1.bf16.xpose.msra.mxu0 0
    %331 = vmatprep.subr.bf16.mxu0 0
    %332 = vmatpush1.bf16.xpose.msra.mxu0 0
    %333 = vmatprep.subr.bf16.mxu0 0
    %334 = vmatpush1.bf16.xpose.msra.mxu0 0
    %335 = vmatprep.subr.bf16.mxu0 0
    %336 = vmatpush1.bf16.xpose.msra.mxu0 0
    %337 = vmatprep.subr.bf16.mxu0 0
    %338 = vmatpush1.bf16.xpose.msra.mxu0 0
    %339 = vmatprep.subr.bf16.mxu0 0
    %340 = vmatpush1.bf16.xpose.msra.mxu0 0
    %341 = vmatprep.subr.bf16.mxu0 0
    %342 = vmatpush1.bf16.xpose.msra.mxu0 0
    %343 = vmatprep.subr.bf16.mxu0 0
    %344 = vmatpush1.bf16.xpose.msra.mxu0 0
    %345 = vmatprep.subr.bf16.mxu0 0
    %346 = vmatpush1.bf16.xpose.msra.mxu0 0
    %347 = vmatprep.subr.bf16.mxu0 0
    %348 = vmatpush1.bf16.xpose.msra.mxu0 0
    %349 = vmatprep.mubr.bf16.mxu0 0
    %350 = vmatmul.mubr.bf16.gmra.mrb[0].mxu0 %v312
    %v351 = vpop.f32.mrb[0].mxu0
    %v352 = vadd.f32 0.0, %v351
    %v353 = vpop.f32.mrb[0].mxu0
    %v354 = vpop.f32.mrb[0].mxu0
    %v355 = vpop.f32.mrb[0].mxu0
    %356 = vdwg.mxu0
    %v357 = vsel %vm151, %v352, -inf
    %358 = vmax.xlane.f32.xlu0 %v357
    %v359 = vpop.xlane.xlu0 %358
    %v360 = vsub.f32 %v352, %v359
    %v361 = vmul.f32 %v360, 1.442695
    %v362 = vpow.pop %v361
    %v363 = vsel %vm151, %v362, 0.0
    %364 = vadd.xlane.f32.xlu0 %v363
    %v365 = vpop.xlane.xlu0 %364
    %v366 = vrcp.pop %v365
    %v367 = vmul.f32 %v362, %v366
    %v368 = vpack.c.bf16 %v367, %v367
    %369 = vrot.lane.b32.xlu0 %v141, 56
    %v370 = vpop.permute.xlu0 %369
    %v372 = vsel %vm151, %v368, 0
    %v375 = vsel %vm215, %v370, 0
    %377 = vmatprep.subr.bf16.mxu0 0
    %378 = vmatpush1.bf16.msra.mxu0 %v375
    %379 = vmatprep.subr.bf16.mxu0 0
    %380 = vmatpush1.bf16.msra.mxu0 0
    %381 = vmatprep.subr.bf16.mxu0 0
    %382 = vmatpush1.bf16.msra.mxu0 0
    %383 = vmatprep.subr.bf16.mxu0 0
    %384 = vmatpush1.bf16.msra.mxu0 0
    %385 = vmatprep.subr.bf16.mxu0 0
    %386 = vmatpush1.bf16.msra.mxu0 0
    %387 = vmatprep.subr.bf16.mxu0 0
    %388 = vmatpush1.bf16.msra.mxu0 0
    %389 = vmatprep.subr.bf16.mxu0 0
    %390 = vmatpush1.bf16.msra.mxu0 0
    %391 = vmatprep.subr.bf16.mxu0 0
    %392 = vmatpush1.bf16.msra.mxu0 0
    %393 = vmatprep.subr.bf16.mxu0 0
    %394 = vmatpush1.bf16.msra.mxu0 0
    %395 = vmatprep.subr.bf16.mxu0 0
    %396 = vmatpush1.bf16.msra.mxu0 0
    %397 = vmatprep.subr.bf16.mxu0 0
    %398 = vmatpush1.bf16.msra.mxu0 0
    %399 = vmatprep.subr.bf16.mxu0 0
    %400 = vmatpush1.bf16.msra.mxu0 0
    %401 = vmatprep.subr.bf16.mxu0 0
    %402 = vmatpush1.bf16.msra.mxu0 0
    %403 = vmatprep.subr.bf16.mxu0 0
    %404 = vmatpush1.bf16.msra.mxu0 0
    %405 = vmatprep.subr.bf16.mxu0 0
    %406 = vmatpush1.bf16.msra.mxu0 0
    %407 = vmatprep.subr.bf16.mxu0 0
    %408 = vmatpush1.bf16.msra.mxu0 0
    %409 = vmatprep.mubr.bf16.mxu0 0
    %410 = vmatmul.mubr.bf16.gmra.mrb[0].mxu0 %v372
    %v411 = vpop.f32.mrb[0].mxu0
    %v412 = vadd.f32 0.0, %v411
    %v413 = vpop.f32.mrb[0].mxu0
    %v414 = vpop.f32.mrb[0].mxu0
    %v415 = vpop.f32.mrb[0].mxu0
    %416 = vdwg.mxu0
    %v417 = vpack.c.bf16 %v412, %v412
    %v419 = vsel %vm151, %v417, 0
    %v422 = vsel %vm215, %v80, 0
    %424 = vmatprep.subr.bf16.mxu0 0
    %425 = vmatpush1.bf16.msra.mxu0 %v422
    %426 = vmatprep.subr.bf16.mxu0 0
    %427 = vmatpush1.bf16.msra.mxu0 0
    %428 = vmatprep.subr.bf16.mxu0 0
    %429 = vmatpush1.bf16.msra.mxu0 0
    %430 = vmatprep.subr.bf16.mxu0 0
    %431 = vmatpush1.bf16.msra.mxu0 0
    %432 = vmatprep.subr.bf16.mxu0 0
    %433 = vmatpush1.bf16.msra.mxu0 0
    %434 = vmatprep.subr.bf16.mxu0 0
    %435 = vmatpush1.bf16.msra.mxu0 0
    %436 = vmatprep.subr.bf16.mxu0 0
    %437 = vmatpush1.bf16.msra.mxu0 0
    %438 = vmatprep.subr.bf16.mxu0 0
    %439 = vmatpush1.bf16.msra.mxu0 0
    %440 = vmatprep.subr.bf16.mxu0 0
    %441 = vmatpush1.bf16.msra.mxu0 0
    %442 = vmatprep.subr.bf16.mxu0 0
    %443 = vmatpush1.bf16.msra.mxu0 0
    %444 = vmatprep.subr.bf16.mxu0 0
    %445 = vmatpush1.bf16.msra.mxu0 0
    %446 = vmatprep.subr.bf16.mxu0 0
    %447 = vmatpush1.bf16.msra.mxu0 0
    %448 = vmatprep.subr.bf16.mxu0 0
    %449 = vmatpush1.bf16.msra.mxu0 0
    %450 = vmatprep.subr.bf16.mxu0 0
    %451 = vmatpush1.bf16.msra.mxu0 0
    %452 = vmatprep.subr.bf16.mxu0 0
    %453 = vmatpush1.bf16.msra.mxu0 0
    %454 = vmatprep.subr.bf16.mxu0 0
    %455 = vmatpush1.bf16.msra.mxu0 0
    %456 = vmatprep.mubr.bf16.mxu0 0
    %457 = vmatmul.mubr.bf16.gmra.mrb[0].mxu0 %v419
    %v458 = vpop.f32.mrb[0].mxu0
    %v459 = vadd.f32 0.0, %v458
    %v460 = vpop.f32.mrb[0].mxu0
    %v461 = vpop.f32.mrb[0].mxu0
    %v462 = vpop.f32.mrb[0].mxu0
    %463 = vdwg.mxu0
    %v464 = vadd.f32 %v306, %v459
    %465 = vrot.lane.b32.xlu0 %v141, 112
    %v466 = vpop.permute.xlu0 %465
    %467 = vrot.lane.b32.xlu0 %v141, 80
    %v468 = vpop.permute.xlu0 %467
    %v470 = vsel %vm151, %v466, 0
    %v473 = vsel %vm151, %v468, 0
    %475 = vmatprep.subr.bf16.mxu0 0
    %476 = vmatpush1.bf16.xpose.msra.mxu0 %v473
    %477 = vmatprep.subr.bf16.mxu0 0
    %478 = vmatpush1.bf16.xpose.msra.mxu0 0
    %479 = vmatprep.subr.bf16.mxu0 0
    %480 = vmatpush1.bf16.xpose.msra.mxu0 0
    %481 = vmatprep.subr.bf16.mxu0 0
    %482 = vmatpush1.bf16.xpose.msra.mxu0 0
    %483 = vmatprep.subr.bf16.mxu0 0
    %484 = vmatpush1.bf16.xpose.msra.mxu0 0
    %485 = vmatprep.subr.bf16.mxu0 0
    %486 = vmatpush1.bf16.xpose.msra.mxu0 0
    %487 = vmatprep.subr.bf16.mxu0 0
    %488 = vmatpush1.bf16.xpose.msra.mxu0 0
    %489 = vmatprep.subr.bf16.mxu0 0
    %490 = vmatpush1.bf16.xpose.msra.mxu0 0
    %491 = vmatprep.subr.bf16.mxu0 0
    %492 = vmatpush1.bf16.xpose.msra.mxu0 0
    %493 = vmatprep.subr.bf16.mxu0 0
    %494 = vmatpush1.bf16.xpose.msra.mxu0 0
    %495 = vmatprep.subr.bf16.mxu0 0
    %496 = vmatpush1.bf16.xpose.msra.mxu0 0
    %497 = vmatprep.subr.bf16.mxu0 0
    %498 = vmatpush1.bf16.xpose.msra.mxu0 0
    %499 = vmatprep.subr.bf16.mxu0 0
    %500 = vmatpush1.bf16.xpose.msra.mxu0 0
    %501 = vmatprep.subr.bf16.mxu0 0
    %502 = vmatpush1.bf16.xpose.msra.mxu0 0
    %503 = vmatprep.subr.bf16.mxu0 0
    %504 = vmatpush1.bf16.xpose.msra.mxu0 0
    %505 = vmatprep.subr.bf16.mxu0 0
    %506 = vmatpush1.bf16.xpose.msra.mxu0 0
    %507 = vmatprep.mubr.bf16.mxu0 0
    %508 = vmatmul.mubr.bf16.gmra.mrb[0].mxu0 %v470
    %v509 = vpop.f32.mrb[0].mxu0
    %v510 = vadd.f32 0.0, %v509
    %v511 = vpop.f32.mrb[0].mxu0
    %v512 = vpop.f32.mrb[0].mxu0
    %v513 = vpop.f32.mrb[0].mxu0
    %514 = vdwg.mxu0
    %v515 = vsel %vm151, %v510, -inf
    %516 = vmax.xlane.f32.xlu0 %v515
    %v517 = vpop.xlane.xlu0 %516
    %v518 = vsub.f32 %v510, %v517
    %v519 = vmul.f32 %v518, 1.442695
    %v520 = vpow.pop %v519
    %v521 = vsel %vm151, %v520, 0.0
    %522 = vadd.xlane.f32.xlu0 %v521
    %v523 = vpop.xlane.xlu0 %522
    %v524 = vrcp.pop %v523
    %v525 = vmul.f32 %v520, %v524
    %v526 = vpack.c.bf16 %v525, %v525
    %527 = vrot.lane.b32.xlu0 %v141, 48
    %v528 = vpop.permute.xlu0 %527
    %v530 = vsel %vm151, %v526, 0
    %v533 = vsel %vm215, %v528, 0
    %535 = vmatprep.subr.bf16.mxu0 0
    %536 = vmatpush1.bf16.msra.mxu0 %v533
    %537 = vmatprep.subr.bf16.mxu0 0
    %538 = vmatpush1.bf16.msra.mxu0 0
    %539 = vmatprep.subr.bf16.mxu0 0
    %540 = vmatpush1.bf16.msra.mxu0 0
    %541 = vmatprep.subr.bf16.mxu0 0
    %542 = vmatpush1.bf16.msra.mxu0 0
    %543 = vmatprep.subr.bf16.mxu0 0
    %544 = vmatpush1.bf16.msra.mxu0 0
    %545 = vmatprep.subr.bf16.mxu0 0
    %546 = vmatpush1.bf16.msra.mxu0 0
    %547 = vmatprep.subr.bf16.mxu0 0
    %548 = vmatpush1.bf16.msra.mxu0 0
    %549 = vmatprep.subr.bf16.mxu0 0
    %550 = vmatpush1.bf16.msra.mxu0 0
    %551 = vmatprep.subr.bf16.mxu0 0
    %552 = vmatpush1.bf16.msra.mxu0 0
    %553 = vmatprep.subr.bf16.mxu0 0
    %554 = vmatpush1.bf16.msra.mxu0 0
    %555 = vmatprep.subr.bf16.mxu0 0
    %556 = vmatpush1.bf16.msra.mxu0 0
    %557 = vmatprep.subr.bf16.mxu0 0
    %558 = vmatpush1.bf16.msra.mxu0 0
    %559 = vmatprep.subr.bf16.mxu0 0
    %560 = vmatpush1.bf16.msra.mxu0 0
    %561 = vmatprep.subr.bf16.mxu0 0
    %562 = vmatpush1.bf16.msra.mxu0 0
    %563 = vmatprep.subr.bf16.mxu0 0
    %564 = vmatpush1.bf16.msra.mxu0 0
    %565 = vmatprep.subr.bf16.mxu0 0
    %566 = vmatpush1.bf16.msra.mxu0 0
    %567 = vmatprep.mubr.bf16.mxu0 0
    %568 = vmatmul.mubr.bf16.gmra.mrb[0].mxu0 %v530
    %v569 = vpop.f32.mrb[0].mxu0
    %v570 = vadd.f32 0.0, %v569
    %v571 = vpop.f32.mrb[0].mxu0
    %v572 = vpop.f32.mrb[0].mxu0
    %v573 = vpop.f32.mrb[0].mxu0
    %574 = vdwg.mxu0
    %v575 = vpack.c.bf16 %v570, %v570
    %v577 = vsel %vm151, %v575, 0
    %v580 = vsel %vm215, %v81, 0
    %582 = vmatprep.subr.bf16.mxu0 0
    %583 = vmatpush1.bf16.msra.mxu0 %v580
    %584 = vmatprep.subr.bf16.mxu0 0
    %585 = vmatpush1.bf16.msra.mxu0 0
    %586 = vmatprep.subr.bf16.mxu0 0
    %587 = vmatpush1.bf16.msra.mxu0 0
    %588 = vmatprep.subr.bf16.mxu0 0
    %589 = vmatpush1.bf16.msra.mxu0 0
    %590 = vmatprep.subr.bf16.mxu0 0
    %591 = vmatpush1.bf16.msra.mxu0 0
    %592 = vmatprep.subr.bf16.mxu0 0
    %593 = vmatpush1.bf16.msra.mxu0 0
    %594 = vmatprep.subr.bf16.mxu0 0
    %595 = vmatpush1.bf16.msra.mxu0 0
    %596 = vmatprep.subr.bf16.mxu0 0
    %597 = vmatpush1.bf16.msra.mxu0 0
    %598 = vmatprep.subr.bf16.mxu0 0
    %599 = vmatpush1.bf16.msra.mxu0 0
    %600 = vmatprep.subr.bf16.mxu0 0
    %601 = vmatpush1.bf16.msra.mxu0 0
    %602 = vmatprep.subr.bf16.mxu0 0
    %603 = vmatpush1.bf16.msra.mxu0 0
    %604 = vmatprep.subr.bf16.mxu0 0
    %605 = vmatpush1.bf16.msra.mxu0 0
    %606 = vmatprep.subr.bf16.mxu0 0
    %607 = vmatpush1.bf16.msra.mxu0 0
    %608 = vmatprep.subr.bf16.mxu0 0
    %609 = vmatpush1.bf16.msra.mxu0 0
    %610 = vmatprep.subr.bf16.mxu0 0
    %611 = vmatpush1.bf16.msra.mxu0 0
    %612 = vmatprep.subr.bf16.mxu0 0
    %613 = vmatpush1.bf16.msra.mxu0 0
    %614 = vmatprep.mubr.bf16.mxu0 0
    %615 = vmatmul.mubr.bf16.gmra.mrb[0].mxu0 %v577
    %v616 = vpop.f32.mrb[0].mxu0
    %v617 = vadd.f32 0.0, %v616
    %v618 = vpop.f32.mrb[0].mxu0
    %v619 = vpop.f32.mrb[0].mxu0
    %v620 = vpop.f32.mrb[0].mxu0
    %621 = vdwg.mxu0
    %v622 = vadd.f32 %v464, %v617
    %623 = vrot.lane.b32.xlu0 %v141, 104
    %v624 = vpop.permute.xlu0 %623
    %625 = vrot.lane.b32.xlu0 %v141, 72
    %v626 = vpop.permute.xlu0 %625
    %v628 = vsel %vm151, %v624, 0
    %v631 = vsel %vm151, %v626, 0
    %633 = vmatprep.subr.bf16.mxu0 0
    %634 = vmatpush1.bf16.xpose.msra.mxu0 %v631
    %635 = vmatprep.subr.bf16.mxu0 0
    %636 = vmatpush1.bf16.xpose.msra.mxu0 0
    %637 = vmatprep.subr.bf16.mxu0 0
    %638 = vmatpush1.bf16.xpose.msra.mxu0 0
    %639 = vmatprep.subr.bf16.mxu0 0
    %640 = vmatpush1.bf16.xpose.msra.mxu0 0
    %641 = vmatprep.subr.bf16.mxu0 0
    %642 = vmatpush1.bf16.xpose.msra.mxu0 0
    %643 = vmatprep.subr.bf16.mxu0 0
    %644 = vmatpush1.bf16.xpose.msra.mxu0 0
    %645 = vmatprep.subr.bf16.mxu0 0
    %646 = vmatpush1.bf16.xpose.msra.mxu0 0
    %647 = vmatprep.subr.bf16.mxu0 0
    %648 = vmatpush1.bf16.xpose.msra.mxu0 0
    %649 = vmatprep.subr.bf16.mxu0 0
    %650 = vmatpush1.bf16.xpose.msra.mxu0 0
    %651 = vmatprep.subr.bf16.mxu0 0
    %652 = vmatpush1.bf16.xpose.msra.mxu0 0
    %653 = vmatprep.subr.bf16.mxu0 0
    %654 = vmatpush1.bf16.xpose.msra.mxu0 0
    %655 = vmatprep.subr.bf16.mxu0 0
    %656 = vmatpush1.bf16.xpose.msra.mxu0 0
    %657 = vmatprep.subr.bf16.mxu0 0
    %658 = vmatpush1.bf16.xpose.msra.mxu0 0
    %659 = vmatprep.subr.bf16.mxu0 0
    %660 = vmatpush1.bf16.xpose.msra.mxu0 0
    %661 = vmatprep.subr.bf16.mxu0 0
    %662 = vmatpush1.bf16.xpose.msra.mxu0 0
    %663 = vmatprep.subr.bf16.mxu0 0
    %664 = vmatpush1.bf16.xpose.msra.mxu0 0
    %665 = vmatprep.mubr.bf16.mxu0 0
    %666 = vmatmul.mubr.bf16.gmra.mrb[0].mxu0 %v628
    %v667 = vpop.f32.mrb[0].mxu0
    %v668 = vadd.f32 0.0, %v667
    %v669 = vpop.f32.mrb[0].mxu0
    %v670 = vpop.f32.mrb[0].mxu0
    %v671 = vpop.f32.mrb[0].mxu0
    %672 = vdwg.mxu0
    %v673 = vsel %vm151, %v668, -inf
    %674 = vmax.xlane.f32.xlu0 %v673
    %v675 = vpop.xlane.xlu0 %674
    %v676 = vsub.f32 %v668, %v675
    %v677 = vmul.f32 %v676, 1.442695
    %v678 = vpow.pop %v677
    %v679 = vsel %vm151, %v678, 0.0
    %680 = vadd.xlane.f32.xlu0 %v679
    %v681 = vpop.xlane.xlu0 %680
    %v682 = vrcp.pop %v681
    %v683 = vmul.f32 %v678, %v682
    %v684 = vpack.c.bf16 %v683, %v683
    %685 = vrot.lane.b32.xlu0 %v141, 40
    %v686 = vpop.permute.xlu0 %685
    %v688 = vsel %vm151, %v684, 0
    %v691 = vsel %vm215, %v686, 0
    %693 = vmatprep.subr.bf16.mxu0 0
    %694 = vmatpush1.bf16.msra.mxu0 %v691
    %695 = vmatprep.subr.bf16.mxu0 0
    %696 = vmatpush1.bf16.msra.mxu0 0
    %697 = vmatprep.subr.bf16.mxu0 0
    %698 = vmatpush1.bf16.msra.mxu0 0
    %699 = vmatprep.subr.bf16.mxu0 0
    %700 = vmatpush1.bf16.msra.mxu0 0
    %701 = vmatprep.subr.bf16.mxu0 0
    %702 = vmatpush1.bf16.msra.mxu0 0
    %703 = vmatprep.subr.bf16.mxu0 0
    %704 = vmatpush1.bf16.msra.mxu0 0
    %705 = vmatprep.subr.bf16.mxu0 0
    %706 = vmatpush1.bf16.msra.mxu0 0
    %707 = vmatprep.subr.bf16.mxu0 0
    %708 = vmatpush1.bf16.msra.mxu0 0
    %709 = vmatprep.subr.bf16.mxu0 0
    %710 = vmatpush1.bf16.msra.mxu0 0
    %711 = vmatprep.subr.bf16.mxu0 0
    %712 = vmatpush1.bf16.msra.mxu0 0
    %713 = vmatprep.subr.bf16.mxu0 0
    %714 = vmatpush1.bf16.msra.mxu0 0
    %715 = vmatprep.subr.bf16.mxu0 0
    %716 = vmatpush1.bf16.msra.mxu0 0
    %717 = vmatprep.subr.bf16.mxu0 0
    %718 = vmatpush1.bf16.msra.mxu0 0
    %719 = vmatprep.subr.bf16.mxu0 0
    %720 = vmatpush1.bf16.msra.mxu0 0
    %721 = vmatprep.subr.bf16.mxu0 0
    %722 = vmatpush1.bf16.msra.mxu0 0
    %723 = vmatprep.subr.bf16.mxu0 0
    %724 = vmatpush1.bf16.msra.mxu0 0
    %725 = vmatprep.mubr.bf16.mxu0 0
    %726 = vmatmul.mubr.bf16.gmra.mrb[0].mxu0 %v688
    %v727 = vpop.f32.mrb[0].mxu0
    %v728 = vadd.f32 0.0, %v727
    %v729 = vpop.f32.mrb[0].mxu0
    %v730 = vpop.f32.mrb[0].mxu0
    %v731 = vpop.f32.mrb[0].mxu0
    %732 = vdwg.mxu0
    %v733 = vpack.c.bf16 %v728, %v728
    %v735 = vsel %vm151, %v733, 0
    %v738 = vsel %vm215, %v82, 0
    %740 = vmatprep.subr.bf16.mxu0 0
    %741 = vmatpush1.bf16.msra.mxu0 %v738
    %742 = vmatprep.subr.bf16.mxu0 0
    %743 = vmatpush1.bf16.msra.mxu0 0
    %744 = vmatprep.subr.bf16.mxu0 0
    %745 = vmatpush1.bf16.msra.mxu0 0
    %746 = vmatprep.subr.bf16.mxu0 0
    %747 = vmatpush1.bf16.msra.mxu0 0
    %748 = vmatprep.subr.bf16.mxu0 0
    %749 = vmatpush1.bf16.msra.mxu0 0
    %750 = vmatprep.subr.bf16.mxu0 0
    %751 = vmatpush1.bf16.msra.mxu0 0
    %752 = vmatprep.subr.bf16.mxu0 0
    %753 = vmatpush1.bf16.msra.mxu0 0
    %754 = vmatprep.subr.bf16.mxu0 0
    %755 = vmatpush1.bf16.msra.mxu0 0
    %756 = vmatprep.subr.bf16.mxu0 0
    %757 = vmatpush1.bf16.msra.mxu0 0
    %758 = vmatprep.subr.bf16.mxu0 0
    %759 = vmatpush1.bf16.msra.mxu0 0
    %760 = vmatprep.subr.bf16.mxu0 0
    %761 = vmatpush1.bf16.msra.mxu0 0
    %762 = vmatprep.subr.bf16.mxu0 0
    %763 = vmatpush1.bf16.msra.mxu0 0
    %764 = vmatprep.subr.bf16.mxu0 0
    %765 = vmatpush1.bf16.msra.mxu0 0
    %766 = vmatprep.subr.bf16.mxu0 0
    %767 = vmatpush1.bf16.msra.mxu0 0
    %768 = vmatprep.subr.bf16.mxu0 0
    %769 = vmatpush1.bf16.msra.mxu0 0
    %770 = vmatprep.subr.bf16.mxu0 0
    %771 = vmatpush1.bf16.msra.mxu0 0
    %772 = vmatprep.mubr.bf16.mxu0 0
    %773 = vmatmul.mubr.bf16.gmra.mrb[0].mxu0 %v735
    %v774 = vpop.f32.mrb[0].mxu0
    %v775 = vadd.f32 0.0, %v774
    %v776 = vpop.f32.mrb[0].mxu0
    %v777 = vpop.f32.mrb[0].mxu0
    %v778 = vpop.f32.mrb[0].mxu0
    %779 = vdwg.mxu0
    %v780 = vadd.f32 %v622, %v775
    %781 = vst.msk [vmem:[#allocation10] sm:$0xff] %vm96, %v780
    %v782 = vrot.slane %v141, 4
    %783 = vrot.lane.b32.xlu0 %v782, 96
    %v784 = vpop.permute.xlu0 %783
    %v786 = vsel %vm151, %v782, 0
    %v789 = vsel %vm151, %v784, 0
    %791 = vmatprep.subr.bf16.mxu0 0
    %792 = vmatpush1.bf16.xpose.msra.mxu0 %v789
    %793 = vmatprep.subr.bf16.mxu0 0
    %794 = vmatpush1.bf16.xpose.msra.mxu0 0
    %795 = vmatprep.subr.bf16.mxu0 0
    %796 = vmatpush1.bf16.xpose.msra.mxu0 0
    %797 = vmatprep.subr.bf16.mxu0 0
    %798 = vmatpush1.bf16.xpose.msra.mxu0 0
    %799 = vmatprep.subr.bf16.mxu0 0
    %800 = vmatpush1.bf16.xpose.msra.mxu0 0
    %801 = vmatprep.subr.bf16.mxu0 0
    %802 = vmatpush1.bf16.xpose.msra.mxu0 0
    %803 = vmatprep.subr.bf16.mxu0 0
    %804 = vmatpush1.bf16.xpose.msra.mxu0 0
    %805 = vmatprep.subr.bf16.mxu0 0
    %806 = vmatpush1.bf16.xpose.msra.mxu0 0
    %807 = vmatprep.subr.bf16.mxu0 0
    %808 = vmatpush1.bf16.xpose.msra.mxu0 0
    %809 = vmatprep.subr.bf16.mxu0 0
    %810 = vmatpush1.bf16.xpose.msra.mxu0 0
    %811 = vmatprep.subr.bf16.mxu0 0
    %812 = vmatpush1.bf16.xpose.msra.mxu0 0
    %813 = vmatprep.subr.bf16.mxu0 0
    %814 = vmatpush1.bf16.xpose.msra.mxu0 0
    %815 = vmatprep.subr.bf16.mxu0 0
    %816 = vmatpush1.bf16.xpose.msra.mxu0 0
    %817 = vmatprep.subr.bf16.mxu0 0
    %818 = vmatpush1.bf16.xpose.msra.mxu0 0
    %819 = vmatprep.subr.bf16.mxu0 0
    %820 = vmatpush1.bf16.xpose.msra.mxu0 0
    %821 = vmatprep.subr.bf16.mxu0 0
    %822 = vmatpush1.bf16.xpose.msra.mxu0 0
    %823 = vmatprep.mubr.bf16.mxu0 0
    %824 = vmatmul.mubr.bf16.gmra.mrb[0].mxu0 %v786
    %v825 = vpop.f32.mrb[0].mxu0
    %v826 = vadd.f32 0.0, %v825
    %v827 = vpop.f32.mrb[0].mxu0
    %v828 = vpop.f32.mrb[0].mxu0
    %v829 = vpop.f32.mrb[0].mxu0
    %830 = vdwg.mxu0
    %v831 = vsel %vm151, %v826, -inf
    %832 = vmax.xlane.f32.xlu0 %v831
    %v833 = vpop.xlane.xlu0 %832
    %v834 = vsub.f32 %v826, %v833
    %v835 = vmul.f32 %v834, 1.442695
    %v836 = vpow.pop %v835
    %v837 = vsel %vm151, %v836, 0.0
    %838 = vadd.xlane.f32.xlu0 %v837
    %v839 = vpop.xlane.xlu0 %838
    %v840 = vrcp.pop %v839
    %v841 = vmul.f32 %v836, %v840
    %v842 = vpack.c.bf16 %v841, %v841
    %843 = vrot.lane.b32.xlu0 %v782, 64
    %v844 = vpop.permute.xlu0 %843
    %v846 = vsel %vm151, %v842, 0
    %v849 = vsel %vm215, %v844, 0
    %851 = vmatprep.subr.bf16.mxu0 0
    %852 = vmatpush1.bf16.msra.mxu0 %v849
    %853 = vmatprep.subr.bf16.mxu0 0
    %854 = vmatpush1.bf16.msra.mxu0 0
    %855 = vmatprep.subr.bf16.mxu0 0
    %856 = vmatpush1.bf16.msra.mxu0 0
    %857 = vmatprep.subr.bf16.mxu0 0
    %858 = vmatpush1.bf16.msra.mxu0 0
    %859 = vmatprep.subr.bf16.mxu0 0
    %860 = vmatpush1.bf16.msra.mxu0 0
    %861 = vmatprep.subr.bf16.mxu0 0
    %862 = vmatpush1.bf16.msra.mxu0 0
    %863 = vmatprep.subr.bf16.mxu0 0
    %864 = vmatpush1.bf16.msra.mxu0 0
    %865 = vmatprep.subr.bf16.mxu0 0
    %866 = vmatpush1.bf16.msra.mxu0 0
    %867 = vmatprep.subr.bf16.mxu0 0
    %868 = vmatpush1.bf16.msra.mxu0 0
    %869 = vmatprep.subr.bf16.mxu0 0
    %870 = vmatpush1.bf16.msra.mxu0 0
    %871 = vmatprep.subr.bf16.mxu0 0
    %872 = vmatpush1.bf16.msra.mxu0 0
    %873 = vmatprep.subr.bf16.mxu0 0
    %874 = vmatpush1.bf16.msra.mxu0 0
    %875 = vmatprep.subr.bf16.mxu0 0
    %876 = vmatpush1.bf16.msra.mxu0 0
    %877 = vmatprep.subr.bf16.mxu0 0
    %878 = vmatpush1.bf16.msra.mxu0 0
    %879 = vmatprep.subr.bf16.mxu0 0
    %880 = vmatpush1.bf16.msra.mxu0 0
    %881 = vmatprep.subr.bf16.mxu0 0
    %882 = vmatpush1.bf16.msra.mxu0 0
    %883 = vmatprep.mubr.bf16.mxu0 0
    %884 = vmatmul.mubr.bf16.gmra.mrb[0].mxu0 %v846
    %v885 = vpop.f32.mrb[0].mxu0
    %v886 = vadd.f32 0.0, %v885
    %v887 = vpop.f32.mrb[0].mxu0
    %v888 = vpop.f32.mrb[0].mxu0
    %v889 = vpop.f32.mrb[0].mxu0
    %890 = vdwg.mxu0
    %v891 = vpack.c.bf16 %v886, %v886
    %v893 = vsel %vm151, %v891, 0
    %895 = vmatprep.subr.bf16.mxu0 0
    %896 = vmatpush1.bf16.msra.mxu0 %v264
    %897 = vmatprep.subr.bf16.mxu0 0
    %898 = vmatpush1.bf16.msra.mxu0 0
    %899 = vmatprep.subr.bf16.mxu0 0
    %900 = vmatpush1.bf16.msra.mxu0 0
    %901 = vmatprep.subr.bf16.mxu0 0
    %902 = vmatpush1.bf16.msra.mxu0 0
    %903 = vmatprep.subr.bf16.mxu0 0
    %904 = vmatpush1.bf16.msra.mxu0 0
    %905 = vmatprep.subr.bf16.mxu0 0
    %906 = vmatpush1.bf16.msra.mxu0 0
    %907 = vmatprep.subr.bf16.mxu0 0
    %908 = vmatpush1.bf16.msra.mxu0 0
    %909 = vmatprep.subr.bf16.mxu0 0
    %910 = vmatpush1.bf16.msra.mxu0 0
    %911 = vmatprep.subr.bf16.mxu0 0
    %912 = vmatpush1.bf16.msra.mxu0 0
    %913 = vmatprep.subr.bf16.mxu0 0
    %914 = vmatpush1.bf16.msra.mxu0 0
    %915 = vmatprep.subr.bf16.mxu0 0
    %916 = vmatpush1.bf16.msra.mxu0 0
    %917 = vmatprep.subr.bf16.mxu0 0
    %918 = vmatpush1.bf16.msra.mxu0 0
    %919 = vmatprep.subr.bf16.mxu0 0
    %920 = vmatpush1.bf16.msra.mxu0 0
    %921 = vmatprep.subr.bf16.mxu0 0
    %922 = vmatpush1.bf16.msra.mxu0 0
    %923 = vmatprep.subr.bf16.mxu0 0
    %924 = vmatpush1.bf16.msra.mxu0 0
    %925 = vmatprep.subr.bf16.mxu0 0
    %926 = vmatpush1.bf16.msra.mxu0 0
    %927 = vmatprep.mubr.bf16.mxu0 0
    %928 = vmatmul.mubr.bf16.gmra.mrb[0].mxu0 %v893
    %v929 = vpop.f32.mrb[0].mxu0
    %v930 = vadd.f32 0.0, %v929
    %v931 = vpop.f32.mrb[0].mxu0
    %v932 = vpop.f32.mrb[0].mxu0
    %v933 = vpop.f32.mrb[0].mxu0
    %934 = vdwg.mxu0
    %v935 = vadd.f32 %v146, %v930
    %936 = vrot.lane.b32.xlu0 %v782, 120
    %v937 = vpop.permute.xlu0 %936
    %938 = vrot.lane.b32.xlu0 %v782, 88
    %v939 = vpop.permute.xlu0 %938
    %v941 = vsel %vm151, %v937, 0
    %v944 = vsel %vm151, %v939, 0
    %946 = vmatprep.subr.bf16.mxu0 0
    %947 = vmatpush1.bf16.xpose.msra.mxu0 %v944
    %948 = vmatprep.subr.bf16.mxu0 0
    %949 = vmatpush1.bf16.xpose.msra.mxu0 0
    %950 = vmatprep.subr.bf16.mxu0 0
    %951 = vmatpush1.bf16.xpose.msra.mxu0 0
    %952 = vmatprep.subr.bf16.mxu0 0
    %953 = vmatpush1.bf16.xpose.msra.mxu0 0
    %954 = vmatprep.subr.bf16.mxu0 0
    %955 = vmatpush1.bf16.xpose.msra.mxu0 0
    %956 = vmatprep.subr.bf16.mxu0 0
    %957 = vmatpush1.bf16.xpose.msra.mxu0 0
    %958 = vmatprep.subr.bf16.mxu0 0
    %959 = vmatpush1.bf16.xpose.msra.mxu0 0
    %960 = vmatprep.subr.bf16.mxu0 0
    %961 = vmatpush1.bf16.xpose.msra.mxu0 0
    %962 = vmatprep.subr.bf16.mxu0 0
    %963 = vmatpush1.bf16.xpose.msra.mxu0 0
    %964 = vmatprep.subr.bf16.mxu0 0
    %965 = vmatpush1.bf16.xpose.msra.mxu0 0
    %966 = vmatprep.subr.bf16.mxu0 0
    %967 = vmatpush1.bf16.xpose.msra.mxu0 0
    %968 = vmatprep.subr.bf16.mxu0 0
    %969 = vmatpush1.bf16.xpose.msra.mxu0 0
    %970 = vmatprep.subr.bf16.mxu0 0
    %971 = vmatpush1.bf16.xpose.msra.mxu0 0
    %972 = vmatprep.subr.bf16.mxu0 0
    %973 = vmatpush1.bf16.xpose.msra.mxu0 0
    %974 = vmatprep.subr.bf16.mxu0 0
    %975 = vmatpush1.bf16.xpose.msra.mxu0 0
    %976 = vmatprep.subr.bf16.mxu0 0
    %977 = vmatpush1.bf16.xpose.msra.mxu0 0
    %978 = vmatprep.mubr.bf16.mxu0 0
    %979 = vmatmul.mubr.bf16.gmra.mrb[0].mxu0 %v941
    %v980 = vpop.f32.mrb[0].mxu0
    %v981 = vadd.f32 0.0, %v980
    %v982 = vpop.f32.mrb[0].mxu0
    %v983 = vpop.f32.mrb[0].mxu0
    %v984 = vpop.f32.mrb[0].mxu0
    %985 = vdwg.mxu0
    %v986 = vsel %vm151, %v981, -inf
    %987 = vmax.xlane.f32.xlu0 %v986
    %v988 = vpop.xlane.xlu0 %987
    %v989 = vsub.f32 %v981, %v988
    %v990 = vmul.f32 %v989, 1.442695
    %v991 = vpow.pop %v990
    %v992 = vsel %vm151, %v991, 0.0
    %993 = vadd.xlane.f32.xlu0 %v992
    %v994 = vpop.xlane.xlu0 %993
    %v995 = vrcp.pop %v994
    %v996 = vmul.f32 %v991, %v995
    %v997 = vpack.c.bf16 %v996, %v996
    %998 = vrot.lane.b32.xlu0 %v782, 56
    %v999 = vpop.permute.xlu0 %998
    %v1001 = vsel %vm151, %v997, 0
    %v1004 = vsel %vm215, %v999, 0
    %1006 = vmatprep.subr.bf16.mxu0 0
    %1007 = vmatpush1.bf16.msra.mxu0 %v1004
    %1008 = vmatprep.subr.bf16.mxu0 0
    %1009 = vmatpush1.bf16.msra.mxu0 0
    %1010 = vmatprep.subr.bf16.mxu0 0
    %1011 = vmatpush1.bf16.msra.mxu0 0
    %1012 = vmatprep.subr.bf16.mxu0 0
    %1013 = vmatpush1.bf16.msra.mxu0 0
    %1014 = vmatprep.subr.bf16.mxu0 0
    %1015 = vmatpush1.bf16.msra.mxu0 0
    %1016 = vmatprep.subr.bf16.mxu0 0
    %1017 = vmatpush1.bf16.msra.mxu0 0
    %1018 = vmatprep.subr.bf16.mxu0 0
    %1019 = vmatpush1.bf16.msra.mxu0 0
    %1020 = vmatprep.subr.bf16.mxu0 0
    %1021 = vmatpush1.bf16.msra.mxu0 0
    %1022 = vmatprep.subr.bf16.mxu0 0
    %1023 = vmatpush1.bf16.msra.mxu0 0
    %1024 = vmatprep.subr.bf16.mxu0 0
    %1025 = vmatpush1.bf16.msra.mxu0 0
    %1026 = vmatprep.subr.bf16.mxu0 0
    %1027 = vmatpush1.bf16.msra.mxu0 0
    %1028 = vmatprep.subr.bf16.mxu0 0
    %1029 = vmatpush1.bf16.msra.mxu0 0
    %1030 = vmatprep.subr.bf16.mxu0 0
    %1031 = vmatpush1.bf16.msra.mxu0 0
    %1032 = vmatprep.subr.bf16.mxu0 0
    %1033 = vmatpush1.bf16.msra.mxu0 0
    %1034 = vmatprep.subr.bf16.mxu0 0
    %1035 = vmatpush1.bf16.msra.mxu0 0
    %1036 = vmatprep.subr.bf16.mxu0 0
    %1037 = vmatpush1.bf16.msra.mxu0 0
    %1038 = vmatprep.mubr.bf16.mxu0 0
    %1039 = vmatmul.mubr.bf16.gmra.mrb[0].mxu0 %v1001
    %v1040 = vpop.f32.mrb[0].mxu0
    %v1041 = vadd.f32 0.0, %v1040
    %v1042 = vpop.f32.mrb[0].mxu0
    %v1043 = vpop.f32.mrb[0].mxu0
    %v1044 = vpop.f32.mrb[0].mxu0
    %1045 = vdwg.mxu0
    %v1046 = vpack.c.bf16 %v1041, %v1041
    %v1048 = vsel %vm151, %v1046, 0
    %1050 = vmatprep.subr.bf16.mxu0 0
    %1051 = vmatpush1.bf16.msra.mxu0 %v422
    %1052 = vmatprep.subr.bf16.mxu0 0
    %1053 = vmatpush1.bf16.msra.mxu0 0
    %1054 = vmatprep.subr.bf16.mxu0 0
    %1055 = vmatpush1.bf16.msra.mxu0 0
    %1056 = vmatprep.subr.bf16.mxu0 0
    %1057 = vmatpush1.bf16.msra.mxu0 0
    %1058 = vmatprep.subr.bf16.mxu0 0
    %1059 = vmatpush1.bf16.msra.mxu0 0
    %1060 = vmatprep.subr.bf16.mxu0 0
    %1061 = vmatpush1.bf16.msra.mxu0 0
    %1062 = vmatprep.subr.bf16.mxu0 0
    %1063 = vmatpush1.bf16.msra.mxu0 0
    %1064 = vmatprep.subr.bf16.mxu0 0
    %1065 = vmatpush1.bf16.msra.mxu0 0
    %1066 = vmatprep.subr.bf16.mxu0 0
    %1067 = vmatpush1.bf16.msra.mxu0 0
    %1068 = vmatprep.subr.bf16.mxu0 0
    %1069 = vmatpush1.bf16.msra.mxu0 0
    %1070 = vmatprep.subr.bf16.mxu0 0
    %1071 = vmatpush1.bf16.msra.mxu0 0
    %1072 = vmatprep.subr.bf16.mxu0 0
    %1073 = vmatpush1.bf16.msra.mxu0 0
    %1074 = vmatprep.subr.bf16.mxu0 0
    %1075 = vmatpush1.bf16.msra.mxu0 0
    %1076 = vmatprep.subr.bf16.mxu0 0
    %1077 = vmatpush1.bf16.msra.mxu0 0
    %1078 = vmatprep.subr.bf16.mxu0 0
    %1079 = vmatpush1.bf16.msra.mxu0 0
    %1080 = vmatprep.subr.bf16.mxu0 0
    %1081 = vmatpush1.bf16.msra.mxu0 0
    %1082 = vmatprep.mubr.bf16.mxu0 0
    %1083 = vmatmul.mubr.bf16.gmra.mrb[0].mxu0 %v1048
    %v1084 = vpop.f32.mrb[0].mxu0
    %v1085 = vadd.f32 0.0, %v1084
    %v1086 = vpop.f32.mrb[0].mxu0
    %v1087 = vpop.f32.mrb[0].mxu0
    %v1088 = vpop.f32.mrb[0].mxu0
    %1089 = vdwg.mxu0
    %v1090 = vadd.f32 %v935, %v1085
    %1091 = vrot.lane.b32.xlu0 %v782, 112
    %v1092 = vpop.permute.xlu0 %1091
    %1093 = vrot.lane.b32.xlu0 %v782, 80
    %v1094 = vpop.permute.xlu0 %1093
    %v1096 = vsel %vm151, %v1092, 0
    %v1099 = vsel %vm151, %v1094, 0
    %1101 = vmatprep.subr.bf16.mxu0 0
    %1102 = vmatpush1.bf16.xpose.msra.mxu0 %v1099
    %1103 = vmatprep.subr.bf16.mxu0 0
    %1104 = vmatpush1.bf16.xpose.msra.mxu0 0
    %1105 = vmatprep.subr.bf16.mxu0 0
    %1106 = vmatpush1.bf16.xpose.msra.mxu0 0
    %1107 = vmatprep.subr.bf16.mxu0 0
    %1108 = vmatpush1.bf16.xpose.msra.mxu0 0
    %1109 = vmatprep.subr.bf16.mxu0 0
    %1110 = vmatpush1.bf16.xpose.msra.mxu0 0
    %1111 = vmatprep.subr.bf16.mxu0 0
    %1112 = vmatpush1.bf16.xpose.msra.mxu0 0
    %1113 = vmatprep.subr.bf16.mxu0 0
    %1114 = vmatpush1.bf16.xpose.msra.mxu0 0
    %1115 = vmatprep.subr.bf16.mxu0 0
    %1116 = vmatpush1.bf16.xpose.msra.mxu0 0
    %1117 = vmatprep.subr.bf16.mxu0 0
    %1118 = vmatpush1.bf16.xpose.msra.mxu0 0
    %1119 = vmatprep.subr.bf16.mxu0 0
    %1120 = vmatpush1.bf16.xpose.msra.mxu0 0
    %1121 = vmatprep.subr.bf16.mxu0 0
    %1122 = vmatpush1.bf16.xpose.msra.mxu0 0
    %1123 = vmatprep.subr.bf16.mxu0 0
    %1124 = vmatpush1.bf16.xpose.msra.mxu0 0
    %1125 = vmatprep.subr.bf16.mxu0 0
    %1126 = vmatpush1.bf16.xpose.msra.mxu0 0
    %1127 = vmatprep.subr.bf16.mxu0 0
    %1128 = vmatpush1.bf16.xpose.msra.mxu0 0
    %1129 = vmatprep.subr.bf16.mxu0 0
    %1130 = vmatpush1.bf16.xpose.msra.mxu0 0
    %1131 = vmatprep.subr.bf16.mxu0 0
    %1132 = vmatpush1.bf16.xpose.msra.mxu0 0
    %1133 = vmatprep.mubr.bf16.mxu0 0
    %1134 = vmatmul.mubr.bf16.gmra.mrb[0].mxu0 %v1096
    %v1135 = vpop.f32.mrb[0].mxu0
    %v1136 = vadd.f32 0.0, %v1135
    %v1137 = vpop.f32.mrb[0].mxu0
    %v1138 = vpop.f32.mrb[0].mxu0
    %v1139 = vpop.f32.mrb[0].mxu0
    %1140 = vdwg.mxu0
    %v1141 = vsel %vm151, %v1136, -inf
    %1142 = vmax.xlane.f32.xlu0 %v1141
    %v1143 = vpop.xlane.xlu0 %1142
    %v1144 = vsub.f32 %v1136, %v1143
    %v1145 = vmul.f32 %v1144, 1.442695
    %v1146 = vpow.pop %v1145
    %v1147 = vsel %vm151, %v1146, 0.0
    %1148 = vadd.xlane.f32.xlu0 %v1147
    %v1149 = vpop.xlane.xlu0 %1148
    %v1150 = vrcp.pop %v1149
    %v1151 = vmul.f32 %v1146, %v1150
    %v1152 = vpack.c.bf16 %v1151, %v1151
    %1153 = vrot.lane.b32.xlu0 %v782, 48
    %v1154 = vpop.permute.xlu0 %1153
    %v1156 = vsel %vm151, %v1152, 0
    %v1159 = vsel %vm215, %v1154, 0
    %1161 = vmatprep.subr.bf16.mxu0 0
    %1162 = vmatpush1.bf16.msra.mxu0 %v1159
    %1163 = vmatprep.subr.bf16.mxu0 0
    %1164 = vmatpush1.bf16.msra.mxu0 0
    %1165 = vmatprep.subr.bf16.mxu0 0
    %1166 = vmatpush1.bf16.msra.mxu0 0
    %1167 = vmatprep.subr.bf16.mxu0 0
    %1168 = vmatpush1.bf16.msra.mxu0 0
    %1169 = vmatprep.subr.bf16.mxu0 0
    %1170 = vmatpush1.bf16.msra.mxu0 0
    %1171 = vmatprep.subr.bf16.mxu0 0
    %1172 = vmatpush1.bf16.msra.mxu0 0
    %1173 = vmatprep.subr.bf16.mxu0 0
    %1174 = vmatpush1.bf16.msra.mxu0 0
    %1175 = vmatprep.subr.bf16.mxu0 0
    %1176 = vmatpush1.bf16.msra.mxu0 0
    %1177 = vmatprep.subr.bf16.mxu0 0
    %1178 = vmatpush1.bf16.msra.mxu0 0
    %1179 = vmatprep.subr.bf16.mxu0 0
    %1180 = vmatpush1.bf16.msra.mxu0 0
    %1181 = vmatprep.subr.bf16.mxu0 0
    %1182 = vmatpush1.bf16.msra.mxu0 0
    %1183 = vmatprep.subr.bf16.mxu0 0
    %1184 = vmatpush1.bf16.msra.mxu0 0
    %1185 = vmatprep.subr.bf16.mxu0 0
    %1186 = vmatpush1.bf16.msra.mxu0 0
    %1187 = vmatprep.subr.bf16.mxu0 0
    %1188 = vmatpush1.bf16.msra.mxu0 0
    %1189 = vmatprep.subr.bf16.mxu0 0
    %1190 = vmatpush1.bf16.msra.mxu0 0
    %1191 = vmatprep.subr.bf16.mxu0 0
    %1192 = vmatpush1.bf16.msra.mxu0 0
    %1193 = vmatprep.mubr.bf16.mxu0 0
    %1194 = vmatmul.mubr.bf16.gmra.mrb[0].mxu0 %v1156
    %v1195 = vpop.f32.mrb[0].mxu0
    %v1196 = vadd.f32 0.0, %v1195
    %v1197 = vpop.f32.mrb[0].mxu0
    %v1198 = vpop.f32.mrb[0].mxu0
    %v1199 = vpop.f32.mrb[0].mxu0
    %1200 = vdwg.mxu0
    %v1201 = vpack.c.bf16 %v1196, %v1196
    %v1203 = vsel %vm151, %v1201, 0
    %1205 = vmatprep.subr.bf16.mxu0 0
    %1206 = vmatpush1.bf16.msra.mxu0 %v580
    %1207 = vmatprep.subr.bf16.mxu0 0
    %1208 = vmatpush1.bf16.msra.mxu0 0
    %1209 = vmatprep.subr.bf16.mxu0 0
    %1210 = vmatpush1.bf16.msra.mxu0 0
    %1211 = vmatprep.subr.bf16.mxu0 0
    %1212 = vmatpush1.bf16.msra.mxu0 0
    %1213 = vmatprep.subr.bf16.mxu0 0
    %1214 = vmatpush1.bf16.msra.mxu0 0
    %1215 = vmatprep.subr.bf16.mxu0 0
    %1216 = vmatpush1.bf16.msra.mxu0 0
    %1217 = vmatprep.subr.bf16.mxu0 0
    %1218 = vmatpush1.bf16.msra.mxu0 0
    %1219 = vmatprep.subr.bf16.mxu0 0
    %1220 = vmatpush1.bf16.msra.mxu0 0
    %1221 = vmatprep.subr.bf16.mxu0 0
    %1222 = vmatpush1.bf16.msra.mxu0 0
    %1223 = vmatprep.subr.bf16.mxu0 0
    %1224 = vmatpush1.bf16.msra.mxu0 0
    %1225 = vmatprep.subr.bf16.mxu0 0
    %1226 = vmatpush1.bf16.msra.mxu0 0
    %1227 = vmatprep.subr.bf16.mxu0 0
    %1228 = vmatpush1.bf16.msra.mxu0 0
    %1229 = vmatprep.subr.bf16.mxu0 0
    %1230 = vmatpush1.bf16.msra.mxu0 0
    %1231 = vmatprep.subr.bf16.mxu0 0
    %1232 = vmatpush1.bf16.msra.mxu0 0
    %1233 = vmatprep.subr.bf16.mxu0 0
    %1234 = vmatpush1.bf16.msra.mxu0 0
    %1235 = vmatprep.subr.bf16.mxu0 0
    %1236 = vmatpush1.bf16.msra.mxu0 0
    %1237 = vmatprep.mubr.bf16.mxu0 0
    %1238 = vmatmul.mubr.bf16.gmra.mrb[0].mxu0 %v1203
    %v1239 = vpop.f32.mrb[0].mxu0
    %v1240 = vadd.f32 0.0, %v1239
    %v1241 = vpop.f32.mrb[0].mxu0
    %v1242 = vpop.f32.mrb[0].mxu0
    %v1243 = vpop.f32.mrb[0].mxu0
    %1244 = vdwg.mxu0
    %v1245 = vadd.f32 %v1090, %v1240
    %1246 = vrot.lane.b32.xlu0 %v782, 104
    %v1247 = vpop.permute.xlu0 %1246
    %1248 = vrot.lane.b32.xlu0 %v782, 72
    %v1249 = vpop.permute.xlu0 %1248
    %v1251 = vsel %vm151, %v1247, 0
    %v1254 = vsel %vm151, %v1249, 0
    %1256 = vmatprep.subr.bf16.mxu0 0
    %1257 = vmatpush1.bf16.xpose.msra.mxu0 %v1254
    %1258 = vmatprep.subr.bf16.mxu0 0
    %1259 = vmatpush1.bf16.xpose.msra.mxu0 0
    %1260 = vmatprep.subr.bf16.mxu0 0
    %1261 = vmatpush1.bf16.xpose.msra.mxu0 0
    %1262 = vmatprep.subr.bf16.mxu0 0
    %1263 = vmatpush1.bf16.xpose.msra.mxu0 0
    %1264 = vmatprep.subr.bf16.mxu0 0
    %1265 = vmatpush1.bf16.xpose.msra.mxu0 0
    %1266 = vmatprep.subr.bf16.mxu0 0
    %1267 = vmatpush1.bf16.xpose.msra.mxu0 0
    %1268 = vmatprep.subr.bf16.mxu0 0
    %1269 = vmatpush1.bf16.xpose.msra.mxu0 0
    %1270 = vmatprep.subr.bf16.mxu0 0
    %1271 = vmatpush1.bf16.xpose.msra.mxu0 0
    %1272 = vmatprep.subr.bf16.mxu0 0
    %1273 = vmatpush1.bf16.xpose.msra.mxu0 0
    %1274 = vmatprep.subr.bf16.mxu0 0
    %1275 = vmatpush1.bf16.xpose.msra.mxu0 0
    %1276 = vmatprep.subr.bf16.mxu0 0
    %1277 = vmatpush1.bf16.xpose.msra.mxu0 0
    %1278 = vmatprep.subr.bf16.mxu0 0
    %1279 = vmatpush1.bf16.xpose.msra.mxu0 0
    %1280 = vmatprep.subr.bf16.mxu0 0
    %1281 = vmatpush1.bf16.xpose.msra.mxu0 0
    %1282 = vmatprep.subr.bf16.mxu0 0
    %1283 = vmatpush1.bf16.xpose.msra.mxu0 0
    %1284 = vmatprep.subr.bf16.mxu0 0
    %1285 = vmatpush1.bf16.xpose.msra.mxu0 0
    %1286 = vmatprep.subr.bf16.mxu0 0
    %1287 = vmatpush1.bf16.xpose.msra.mxu0 0
    %1288 = vmatprep.mubr.bf16.mxu0 0
    %1289 = vmatmul.mubr.bf16.gmra.mrb[0].mxu0 %v1251
    %v1290 = vpop.f32.mrb[0].mxu0
    %v1291 = vadd.f32 0.0, %v1290
    %v1292 = vpop.f32.mrb[0].mxu0
    %v1293 = vpop.f32.mrb[0].mxu0
    %v1294 = vpop.f32.mrb[0].mxu0
    %1295 = vdwg.mxu0
    %v1296 = vsel %vm151, %v1291, -inf
    %1297 = vmax.xlane.f32.xlu0 %v1296
    %v1298 = vpop.xlane.xlu0 %1297
    %v1299 = vsub.f32 %v1291, %v1298
    %v1300 = vmul.f32 %v1299, 1.442695
    %v1301 = vpow.pop %v1300
    %v1302 = vsel %vm151, %v1301, 0.0
    %1303 = vadd.xlane.f32.xlu0 %v1302
    %v1304 = vpop.xlane.xlu0 %1303
    %v1305 = vrcp.pop %v1304
    %v1306 = vmul.f32 %v1301, %v1305
    %v1307 = vpack.c.bf16 %v1306, %v1306
    %1308 = vrot.lane.b32.xlu0 %v782, 40
    %v1309 = vpop.permute.xlu0 %1308
    %v1311 = vsel %vm151, %v1307, 0
    %v1314 = vsel %vm215, %v1309, 0
    %1316 = vmatprep.subr.bf16.mxu0 0
    %1317 = vmatpush1.bf16.msra.mxu0 %v1314
    %1318 = vmatprep.subr.bf16.mxu0 0
    %1319 = vmatpush1.bf16.msra.mxu0 0
    %1320 = vmatprep.subr.bf16.mxu0 0
    %1321 = vmatpush1.bf16.msra.mxu0 0
    %1322 = vmatprep.subr.bf16.mxu0 0
    %1323 = vmatpush1.bf16.msra.mxu0 0
    %1324 = vmatprep.subr.bf16.mxu0 0
    %1325 = vmatpush1.bf16.msra.mxu0 0
    %1326 = vmatprep.subr.bf16.mxu0 0
    %1327 = vmatpush1.bf16.msra.mxu0 0
    %1328 = vmatprep.subr.bf16.mxu0 0
    %1329 = vmatpush1.bf16.msra.mxu0 0
    %1330 = vmatprep.subr.bf16.mxu0 0
    %1331 = vmatpush1.bf16.msra.mxu0 0
    %1332 = vmatprep.subr.bf16.mxu0 0
    %1333 = vmatpush1.bf16.msra.mxu0 0
    %1334 = vmatprep.subr.bf16.mxu0 0
    %1335 = vmatpush1.bf16.msra.mxu0 0
    %1336 = vmatprep.subr.bf16.mxu0 0
    %1337 = vmatpush1.bf16.msra.mxu0 0
    %1338 = vmatprep.subr.bf16.mxu0 0
    %1339 = vmatpush1.bf16.msra.mxu0 0
    %1340 = vmatprep.subr.bf16.mxu0 0
    %1341 = vmatpush1.bf16.msra.mxu0 0
    %1342 = vmatprep.subr.bf16.mxu0 0
    %1343 = vmatpush1.bf16.msra.mxu0 0
    %1344 = vmatprep.subr.bf16.mxu0 0
    %1345 = vmatpush1.bf16.msra.mxu0 0
    %1346 = vmatprep.subr.bf16.mxu0 0
    %1347 = vmatpush1.bf16.msra.mxu0 0
    %1348 = vmatprep.mubr.bf16.mxu0 0
    %1349 = vmatmul.mubr.bf16.gmra.mrb[0].mxu0 %v1311
    %v1350 = vpop.f32.mrb[0].mxu0
    %v1351 = vadd.f32 0.0, %v1350
    %v1352 = vpop.f32.mrb[0].mxu0
    %v1353 = vpop.f32.mrb[0].mxu0
    %v1354 = vpop.f32.mrb[0].mxu0
    %1355 = vdwg.mxu0
    %v1356 = vpack.c.bf16 %v1351, %v1351
    %v1358 = vsel %vm151, %v1356, 0
    %1360 = vmatprep.subr.bf16.mxu0 0
    %1361 = vmatpush1.bf16.msra.mxu0 %v738
    %1362 = vmatprep.subr.bf16.mxu0 0
    %1363 = vmatpush1.bf16.msra.mxu0 0
    %1364 = vmatprep.subr.bf16.mxu0 0
    %1365 = vmatpush1.bf16.msra.mxu0 0
    %1366 = vmatprep.subr.bf16.mxu0 0
    %1367 = vmatpush1.bf16.msra.mxu0 0
    %1368 = vmatprep.subr.bf16.mxu0 0
    %1369 = vmatpush1.bf16.msra.mxu0 0
    %1370 = vmatprep.subr.bf16.mxu0 0
    %1371 = vmatpush1.bf16.msra.mxu0 0
    %1372 = vmatprep.subr.bf16.mxu0 0
    %1373 = vmatpush1.bf16.msra.mxu0 0
    %1374 = vmatprep.subr.bf16.mxu0 0
    %1375 = vmatpush1.bf16.msra.mxu0 0
    %1376 = vmatprep.subr.bf16.mxu0 0
    %1377 = vmatpush1.bf16.msra.mxu0 0
    %1378 = vmatprep.subr.bf16.mxu0 0
    %1379 = vmatpush1.bf16.msra.mxu0 0
    %1380 = vmatprep.subr.bf16.mxu0 0
    %1381 = vmatpush1.bf16.msra.mxu0 0
    %1382 = vmatprep.subr.bf16.mxu0 0
    %1383 = vmatpush1.bf16.msra.mxu0 0
    %1384 = vmatprep.subr.bf16.mxu0 0
    %1385 = vmatpush1.bf16.msra.mxu0 0
    %1386 = vmatprep.subr.bf16.mxu0 0
    %1387 = vmatpush1.bf16.msra.mxu0 0
    %1388 = vmatprep.subr.bf16.mxu0 0
    %1389 = vmatpush1.bf16.msra.mxu0 0
    %1390 = vmatprep.subr.bf16.mxu0 0
    %1391 = vmatpush1.bf16.msra.mxu0 0
    %1392 = vmatprep.mubr.bf16.mxu0 0
    %1393 = vmatmul.mubr.bf16.gmra.mrb[0].mxu0 %v1358
    %v1394 = vpop.f32.mrb[0].mxu0
    %v1395 = vadd.f32 0.0, %v1394
    %v1396 = vpop.f32.mrb[0].mxu0
    %v1397 = vpop.f32.mrb[0].mxu0
    %v1398 = vpop.f32.mrb[0].mxu0
    %1399 = vdwg.mxu0
    %v1400 = vadd.f32 %v1245, %v1395
    %s1401 = scalar_lea.vmem [#allocation10], 8
    %1402 = vst.msk [vmem:[%s1401] sm:$0xff] %vm96, %v1400
    // Predicated region
    $region34: #{tpu_custom_call.1} parent=1 // pred_check
      _
    $region35: #{tpu_custom_call.1} parent=1 // pred_check_branch
      %1404 = sbr.rel (0) target = $region37
    $region36: #{tpu_custom_call.1} parent=1 // pred_region
      %s1406 = ssub.s32 256, 256
      %1407 = vsyncadd [#allocation4], %s1406
      %s1408 = sshll.u32 [#allocation10], 4
      %s1409 = int_to_ptr.vmem [resolvable:$true] %s1408
      %1414 = dma.vmem_to_hbm [thread:$0]  %s1409, 256, %s4, [#allocation4], 128, 128, 8
    $region37: #{tpu_custom_call.1} parent=1 // pred_fallthru
      _
    // Predicated region
    $region38: #{tpu_custom_call.1} parent=1 // pred_check
      _
    $region39: #{tpu_custom_call.1} parent=1 // pred_check_branch
      %1416 = sbr.rel (0) target = $region41
    $region40: #{tpu_custom_call.1} parent=1 // pred_region
      %1417 = dma.done [#allocation4], 256
    $region41: #{tpu_custom_call.1} parent=1 // pred_fallthru
      _
    %1418 = vsyncpa [#allocation3], 1
    %1419 = vsyncpa [#allocation6], 1
    %1420 = vsyncpa [#allocation9], 1
    %1421 = vsyncpa [#allocation4], 1

</llo_original>
